<compile_context>
chip_gen: v5e
topology: v5e:2x2
jax: 0.10.0
libtpu: 0.0.40
codegen_flags: <defaults>
</compile_context>

<pallas_src>
import jax
import jax.numpy as jnp
from jax import lax
from jax.experimental import pallas as pl
from jax.experimental.pallas import tpu as pltpu


def _round_up(x, m):
    return (x + m - 1) // m * m


def _vmem_capacity_bytes():
    try:
        return int(pltpu.get_tpu_info().vmem_capacity_bytes)
    except Exception:
        return 64 << 20  # conservative default (v7x per-TC VMEM)


# ---------------------------------------------------------------------------
# Fused path: node table resident in VMEM, in-kernel one-hot MXU gather.
# ---------------------------------------------------------------------------
def _fused_kernel(src_ref, dst_ref, ht_ref, out_ref):
    """src/dst: (1, TE) int32 endpoints; ht: (D, N) resident node table (h.T);
    out: (1, TE) float32 scores (edges on the lane axis)."""
    n = ht_ref.shape[1]
    te = src_ref.shape[1]
    node_ids = lax.broadcasted_iota(jnp.int32, (n, te), 0)
    # One-hot selection matrices (exact 0/1 values).
    oh_s = (node_ids == src_ref[...]).astype(ht_ref.dtype)        # (N, TE)
    oh_d = (node_ids == dst_ref[...]).astype(ht_ref.dtype)        # (N, TE)
    ht = ht_ref[...]                                              # (D, N)
    # (D, N) @ (N, TE) -> (D, TE): a gather (single nonzero per column).
    # HIGHEST keeps full f32 feature precision through the MXU.
    dims = (((1,), (0,)), ((), ()))
    hs_t = lax.dot_general(ht, oh_s, dims,
                           precision=lax.Precision.HIGHEST,
                           preferred_element_type=jnp.float32)
    hd_t = lax.dot_general(ht, oh_d, dims,
                           precision=lax.Precision.HIGHEST,
                           preferred_element_type=jnp.float32)
    # u_dot_v: elementwise product + sublane sum over D -> lane-dense (1, TE).
    out_ref[...] = jnp.sum(hs_t * hd_t, axis=0, keepdims=True)


# ---------------------------------------------------------------------------
# Fallback path: XLA pre-gathered, transposed endpoint streams.
# ---------------------------------------------------------------------------
def _pregather_kernel(hs_ref, hd_ref, out_ref):
    """hs/hd: (D, TE) transposed endpoint features; out: (1, TE) float32."""
    prod = hs_ref[...].astype(jnp.float32) * hd_ref[...].astype(jnp.float32)
    out_ref[...] = jnp.sum(prod, axis=0, keepdims=True)


def dot_predictor(src, dst, h, *, max_edges_per_block=4096,
                  force_pregather=False):
    """score[e] = <h[src[e]], h[dst[e]]>; returns float32 [E]."""
    E = int(src.shape[0])
    N, D = h.shape
    if E == 0:
        return jnp.zeros((0,), jnp.float32)

    src = src.astype(jnp.int32)
    dst = dst.astype(jnp.int32)
    dsize = jnp.dtype(h.dtype).itemsize

    vmem_cap = _vmem_capacity_bytes()
    vmem_limit = int(vmem_cap * 3 // 4)     # explicit scoped-VMEM raise
    budget = vmem_cap // 3                  # bytes allowed for blocked data

    table_bytes = N * D * dsize
    use_fused = (not force_pregather) and (N <= 2048) and (
        2 * table_bytes <= budget // 2)

    # --- edge-block sizing (scaled with D / N, multiple of 128 lanes) ------
    if use_fused:
        # one-hots + gathered features + product + index/output blocks.
        per_edge = 2 * N * dsize + 3 * D * 4 + 4 * 4 + 2 * 4
        avail = max(budget - 2 * table_bytes, 128 * per_edge)
        te_cap = max(128,
                     (min(max_edges_per_block, avail // per_edge) // 128) * 128)
    else:
        # 2 input streams x 2 pipeline buffers of (D, te) blocks (+ output).
        per_edge = 2 * 2 * D * dsize + 2 * 4
        te_cap = max(128, (budget // per_edge // 128) * 128)

    # Keep >= 2 grid steps when there is enough work (v7x megacore).
    te = min(te_cap, _round_up(max(pl.cdiv(E, 2), 1), 128))
    e_pad = _round_up(E, te)
    grid = (e_pad // te,)

    pad = e_pad - E
    if pad:
        # Padded edges point at node 0; their scores are sliced off below.
        src = jnp.pad(src, (0, pad))
        dst = jnp.pad(dst, (0, pad))

    compiler_params = pltpu.CompilerParams(
        dimension_semantics=("parallel",),
        vmem_limit_bytes=vmem_limit,
    )

    if use_fused:
        ht = h.T                                            # (D, N), DMA'd once
        cost = pl.CostEstimate(
            flops=4 * N * D * e_pad + 2 * D * e_pad,
            transcendentals=0,
            bytes_accessed=table_bytes + 3 * e_pad * 4,
        )
        out = pl.pallas_call(
            _fused_kernel,
            out_shape=jax.ShapeDtypeStruct((1, e_pad), jnp.float32),
            grid=grid,
            in_specs=[
                pl.BlockSpec((1, te), lambda i: (0, i)),    # src ids
                pl.BlockSpec((1, te), lambda i: (0, i)),    # dst ids
                pl.BlockSpec((D, N), lambda i: (0, 0)),     # resident h.T
            ],
            out_specs=pl.BlockSpec((1, te), lambda i: (0, i)),
            compiler_params=compiler_params,
            cost_estimate=cost,
        )(src.reshape(1, e_pad), dst.reshape(1, e_pad), ht)
    else:
        # TODO(synk): for node tables far larger than VMEM, an in-kernel
        # double-buffered DMA row-gather (memory_space=pl.ANY) would fuse the
        # gather too; kept as a simple streaming fallback here.
        ht = h.T                                            # (D, N)
        hs_t = jnp.take(ht, src, axis=1)                    # (D, e_pad)
        hd_t = jnp.take(ht, dst, axis=1)                    # (D, e_pad)
        cost = pl.CostEstimate(
            flops=2 * D * e_pad,
            transcendentals=0,
            bytes_accessed=2 * e_pad * D * dsize + e_pad * 4,
        )
        out = pl.pallas_call(
            _pregather_kernel,
            out_shape=jax.ShapeDtypeStruct((1, e_pad), jnp.float32),
            grid=grid,
            in_specs=[
                pl.BlockSpec((D, te), lambda i: (0, i)),
                pl.BlockSpec((D, te), lambda i: (0, i)),
            ],
            out_specs=pl.BlockSpec((1, te), lambda i: (0, i)),
            compiler_params=compiler_params,
            cost_estimate=cost,
        )(hs_t, hd_t)

    return out[0, :E]   # matches g.edata['score'][:, 0]


if __name__ == "__main__":
    key = jax.random.PRNGKey(0)
    k_h, k_src, k_dst = jax.random.split(key, 3)

    # Small synthetic graph: 64 nodes, h_feat = 32, 300 edges (ragged E to
    # exercise padding and a multi-step parallel grid).
    N, D, E = 64, 32, 300
    h = jax.random.normal(k_h, (N, D), dtype=jnp.float32)
    src = jax.random.randint(k_src, (E,), 0, N, dtype=jnp.int32)
    dst = jax.random.randint(k_dst, (E,), 0, N, dtype=jnp.int32)

    # Reference (plain JAX) u_dot_v semantics.
    ref = jnp.sum(h[src] * h[dst], axis=-1)

    # Fused in-kernel-gather path (default for small node tables).
    score = jax.block_until_ready(dot_predictor(src, dst, h))
    assert score.shape == (E,)
    assert jnp.allclose(score, ref, atol=1e-3, rtol=1e-3)

    # Streaming pre-gather fallback path (used for huge node tables).
    score_fb = jax.block_until_ready(
        dot_predictor(src, dst, h, force_pregather=True))
    assert score_fb.shape == (E,)
    assert jnp.allclose(score_fb, ref, atol=1e-3, rtol=1e-3)

    print("KERNEL_OK")
</pallas_src>

<mosaic_0001>
module attributes {stable_mosaic.version = 11 : i64} {
  func.func @_fused_kernel(%arg0: i32, %arg1: memref<1x256xi32, #tpu.memory_space<vmem>>, %arg2: memref<1x256xi32, #tpu.memory_space<vmem>>, %arg3: memref<32x64xf32, #tpu.memory_space<vmem>>, %arg4: memref<1x256xf32, #tpu.memory_space<vmem>>) attributes {dimension_semantics = [#tpu.dimension_semantics<parallel>], iteration_bounds = array<i64: 2>, scalar_prefetch = 0 : i64, scratch_operands = 0 : i64, tpu.core_type = #tpu.core_type<tc>, window_params = [{transform_indices = @transform_0, window_bounds = array<i64: 1, 256>}, {transform_indices = @transform_1, window_bounds = array<i64: 1, 256>}, {pipeline_mode = #tpu.pipeline_mode<synchronous>, transform_indices = @transform_2, window_bounds = array<i64: 32, 64>}, {transform_indices = @transform_3, window_bounds = array<i64: 1, 256>}]} {
    %0 = tpu.iota {dimensions = array<i32: 0>} : vector<64x256xi32>
    %c0 = arith.constant 0 : index
    %c0_0 = arith.constant 0 : index
    %1 = vector.load %arg1[%c0, %c0_0] : memref<1x256xi32, #tpu.memory_space<vmem>>, vector<1x256xi32>
    %2 = vector.broadcast %1 : vector<1x256xi32> to vector<64x256xi32>
    %3 = arith.cmpi eq, %0, %2 : vector<64x256xi32>
    %4 = arith.extui %3 : vector<64x256xi1> to vector<64x256xi32>
    %5 = arith.sitofp %4 : vector<64x256xi32> to vector<64x256xf32>
    %c0_1 = arith.constant 0 : index
    %c0_2 = arith.constant 0 : index
    %6 = vector.load %arg2[%c0_1, %c0_2] : memref<1x256xi32, #tpu.memory_space<vmem>>, vector<1x256xi32>
    %7 = vector.broadcast %6 : vector<1x256xi32> to vector<64x256xi32>
    %8 = arith.cmpi eq, %0, %7 : vector<64x256xi32>
    %9 = arith.extui %8 : vector<64x256xi1> to vector<64x256xi32>
    %10 = arith.sitofp %9 : vector<64x256xi32> to vector<64x256xf32>
    %c0_3 = arith.constant 0 : index
    %c0_4 = arith.constant 0 : index
    %11 = vector.load %arg3[%c0_3, %c0_4] : memref<32x64xf32, #tpu.memory_space<vmem>>, vector<32x64xf32>
    %cst = arith.constant dense<0.000000e+00> : vector<32x256xf32>
    %12 = tpu.matmul %11, %5, %cst {dimension_numbers = #tpu.dot_dimension_numbers<[1], [0], [0], [1], [0, 0, 1, 1], [], []>, precision = #tpu.contract_precision<fp32>} : vector<32x64xf32>, vector<64x256xf32>, vector<32x256xf32> -> vector<32x256xf32>
    %cst_5 = arith.constant dense<0.000000e+00> : vector<32x256xf32>
    %13 = tpu.matmul %11, %10, %cst_5 {dimension_numbers = #tpu.dot_dimension_numbers<[1], [0], [0], [1], [0, 0, 1, 1], [], []>, precision = #tpu.contract_precision<fp32>} : vector<32x64xf32>, vector<64x256xf32>, vector<32x256xf32> -> vector<32x256xf32>
    %14 = arith.mulf %12, %13 : vector<32x256xf32>
    %cst_6 = arith.constant dense<0.000000e+00> : vector<256xf32>
    %15 = vector.multi_reduction <add>, %14, %cst_6 [0] : vector<32x256xf32> to vector<256xf32>
    %16 = vector.shape_cast %15 : vector<256xf32> to vector<1x256xf32>
    %c0_7 = arith.constant 0 : index
    %c0_8 = arith.constant 0 : index
    %17 = vector.load %arg4[%c0_7, %c0_8] : memref<1x256xf32, #tpu.memory_space<vmem>>, vector<1x256xf32>
    tpu.vector_store %arg4[%c0_7, %c0_8], %16 {strides = array<i32>} : memref<1x256xf32, #tpu.memory_space<vmem>>, vector<1x256xf32>,
    return
  }
  func.func @transform_0(%arg0: i32) -> (i32, i32) {
    %c0_i32 = arith.constant 0 : i32
    %c0_i32_0 = arith.constant 0 : i32
    return %c0_i32, %arg0 : i32, i32
  }
  func.func @transform_1(%arg0: i32) -> (i32, i32) {
    %c0_i32 = arith.constant 0 : i32
    %c0_i32_0 = arith.constant 0 : i32
    return %c0_i32, %arg0 : i32, i32
  }
  func.func @transform_2(%arg0: i32) -> (i32, i32) {
    %c0_i32 = arith.constant 0 : i32
    %c0_i32_0 = arith.constant 0 : i32
    %c0_i32_1 = arith.constant 0 : i32
    return %c0_i32, %c0_i32_0 : i32, i32
  }
  func.func @transform_3(%arg0: i32) -> (i32, i32) {
    %c0_i32 = arith.constant 0 : i32
    %c0_i32_0 = arith.constant 0 : i32
    return %c0_i32, %arg0 : i32, i32
  }
}

</mosaic_0001>

<llo_original>
// kernel: tpu_custom_call.1
$region0: #{tpu_custom_call.1}
  #allocation0 [shape = 'u32[]', space=smem, size = 0x4, offset = 0x4, fixed_abs, tag = 'smem constant byte address 0x4 - core index']
  #allocation1 [shape = 'u32[72,128]{1,0:T(1,128)}', space=vmem, size = 0x9000, scoped, tag = 'internal scratch']
  %s0 = inlined_call_operand.hbm [shape: s32[1,512], index: 0, kind: input, shape index: {}]
  %s1 = inlined_call_operand.hbm [shape: s32[1,512], index: 1, kind: input, shape index: {}]
  %s2 = inlined_call_operand.hbm [shape: f32[32,64], index: 2, kind: input, shape index: {}]
  %s3 = inlined_call_operand.hbm [shape: f32[1,512], index: 3, kind: output, shape index: {}]
  %s4 = sld [smem:[#allocation0]]
  $region57: #{tpu_custom_call.1} parent=0
    _
  %s6 = ssub.s32 1, %s4
  %s7 = scalar_select 0, %s6, %s4
  $region1: #{tpu_custom_call.1} parent=0
    #allocation2 [shape = 'u8[2048]{0}', space=vmem, size = 0x800, scoped, tag = 'input window, operand 0']
    #allocation3 [shape = 's32[2]{0}', space=sflag, size = 0x8, scoped, tag = 'scoped memory for tpu_custom_call.1']
    #allocation4 [shape = 's32[2]{0}', space=sflag, size = 0x8, scoped, tag = 'scoped memory for tpu_custom_call.1']
    #allocation5 [shape = 'u8[2048]{0}', space=vmem, size = 0x800, scoped, tag = 'input window, operand 1']
    #allocation6 [shape = 's32[2]{0}', space=sflag, size = 0x8, scoped, tag = 'scoped memory for tpu_custom_call.1']
    #allocation7 [shape = 'u8[16384]{0}', space=vmem, size = 0x4000, scoped, tag = 'input window, operand 2, single buffered']
    #allocation8 [shape = 'u8[2048]{0}', space=vmem, size = 0x800, scoped, tag = 'output window, operand 0']
    %8 = vsyncpa [#allocation3], 0
    %s9 = scalar_lea.sflag [#allocation3], 1
    %10 = vsyncpa %s9, 0
    %11 = vsyncpa [#allocation6], 0
    %s12 = scalar_lea.sflag [#allocation6], 1
    %13 = vsyncpa %s12, 0
    %14 = vsyncpa [#allocation4], 0
    %s15 = scalar_lea.sflag [#allocation4], 1
    %16 = vsyncpa %s15, 0
    loop: start=0, step=1, limit=4
    $region2: #{tpu_custom_call.1} parent=1 // loop_pre_header
      _
    $region3: #{tpu_custom_call.1} parent=1 // loop_header
      %s18 = sphi 0, %s22
      %p19 = scmp.ge.s32.totalorder %s18, 4
      %s28 = sphi 0, %s30
      %s31 = sphi 0, %s28
      %s32 = sphi 0, %s31
      %s48 = sphi 0, %s32
      %s54 = sphi 0, %s56
      %s57 = sphi 0, %s54
      %s58 = sphi 0, %s57
      %s74 = sphi 0, %s58
      %s78 = sphi 0, %s78
      %s80 = sphi 0, %s78
      %s81 = sphi 0, %s80
      %s95 = sphi 0, %s81
      %s101 = sphi 0, %s103
      %s104 = sphi 0, %s101
      %s105 = sphi 0, %s104
      %s121 = sphi 0, %s105
    $region4: #{tpu_custom_call.1} parent=1 // loop_header_branch
      %21 = sbr.rel (%p19) target = $region8
    $region5: #{tpu_custom_call.1} parent=1 // loop_body
      %s23 = ssub.s32 %s18, 1
      %s24 = ssub.s32 %s18, 2
      %s25 = sadd.s32 %s18, 1
      %s26 = ssub.s32 %s18, %s25
      %p27 = scmp.eq.s32.totalorder %s26, 0
      %s29 = sadd.s32 %s28, 1
      %s30 = scalar_select %p27, %s28, %s29
      %p33 = pneg %p27
      %p34 = scmp.eq.s32.totalorder %s18, 1
      %p35 = por %p33, %p34
      %p36 = scmp.ne.s32.totalorder %s28, %s31
      %p37 = scmp.eq.s32.totalorder %s18, 0
      %p38 = por %p36, %p37
      %p39 = scmp.ne.s32.totalorder %s28, %s31
      %p40 = scmp.eq.s32.totalorder %s23, 1
      %p41 = por %p39, %p40
      %p42 = scmp.ne.s32.totalorder %s31, %s32
      %p43 = scmp.eq.s32.totalorder %s23, 0
      %p44 = por %p42, %p43
      %p45 = scmp.ne.s32.totalorder %s31, %s32
      %p46 = scmp.eq.s32.totalorder %s24, 1
      %p47 = por %p45, %p46
      %p49 = scmp.ne.s32.totalorder %s32, %s48
      %p50 = scmp.eq.s32.totalorder %s24, 0
      %p51 = por %p49, %p50
      %s52 = ssub.s32 %s18, %s25
      %p53 = scmp.eq.s32.totalorder %s52, 0
      %s55 = sadd.s32 %s54, 1
      %s56 = scalar_select %p53, %s54, %s55
      %p59 = pneg %p53
      %p60 = scmp.eq.s32.totalorder %s18, 1
      %p61 = por %p59, %p60
      %p62 = scmp.ne.s32.totalorder %s54, %s57
      %p63 = scmp.eq.s32.totalorder %s18, 0
      %p64 = por %p62, %p63
      %p65 = scmp.ne.s32.totalorder %s54, %s57
      %p66 = scmp.eq.s32.totalorder %s23, 1
      %p67 = por %p65, %p66
      %p68 = scmp.ne.s32.totalorder %s57, %s58
      %p69 = scmp.eq.s32.totalorder %s23, 0
      %p70 = por %p68, %p69
      %p71 = scmp.ne.s32.totalorder %s57, %s58
      %p72 = scmp.eq.s32.totalorder %s24, 1
      %p73 = por %p71, %p72
      %p75 = scmp.ne.s32.totalorder %s58, %s74
      %p76 = scmp.eq.s32.totalorder %s24, 0
      %p77 = por %p75, %p76
      %s79 = sadd.s32 %s78, 1
      %p82 = scmp.eq.s32.totalorder %s18, 1
      %p83 = scmp.ne.s32.totalorder %s78, %s80
      %p84 = scmp.eq.s32.totalorder %s18, 0
      %p85 = por %p83, %p84
      %p86 = scmp.ne.s32.totalorder %s78, %s80
      %p87 = scmp.eq.s32.totalorder %s23, 1
      %p88 = por %p86, %p87
      %p89 = scmp.ne.s32.totalorder %s80, %s81
      %p90 = scmp.eq.s32.totalorder %s23, 0
      %p91 = por %p89, %p90
      %p92 = scmp.ne.s32.totalorder %s80, %s81
      %p93 = scmp.eq.s32.totalorder %s24, 1
      %p94 = por %p92, %p93
      %p96 = scmp.ne.s32.totalorder %s81, %s95
      %p97 = scmp.eq.s32.totalorder %s24, 0
      %p98 = por %p96, %p97
      %s99 = ssub.s32 %s18, %s25
      %p100 = scmp.eq.s32.totalorder %s99, 0
      %s102 = sadd.s32 %s101, 1
      %s103 = scalar_select %p100, %s101, %s102
      %p106 = pneg %p100
      %p107 = scmp.eq.s32.totalorder %s18, 1
      %p108 = por %p106, %p107
      %p109 = scmp.ne.s32.totalorder %s101, %s104
      %p110 = scmp.eq.s32.totalorder %s18, 0
      %p111 = por %p109, %p110
      %p112 = scmp.ne.s32.totalorder %s101, %s104
      %p113 = scmp.eq.s32.totalorder %s23, 1
      %p114 = por %p112, %p113
      %p115 = scmp.ne.s32.totalorder %s104, %s105
      %p116 = scmp.eq.s32.totalorder %s23, 0
      %p117 = por %p115, %p116
      %p118 = scmp.ne.s32.totalorder %s104, %s105
      %p119 = scmp.eq.s32.totalorder %s24, 1
      %p120 = por %p118, %p119
      %p122 = scmp.ne.s32.totalorder %s105, %s121
      %p123 = scmp.eq.s32.totalorder %s24, 0
      %p124 = por %p122, %p123
      %p125 = scmp.le.s32.totalorder 1, %s18
      %p126 = scmp.lt.s32.totalorder %s18, 3
      %p127 = pnand %p125, %p126
      %p128 = pneg %p127
      // Predicated region
      $region9: #{tpu_custom_call.1} parent=5 // pred_check
        _
      $region10: #{tpu_custom_call.1} parent=5 // pred_check_branch
        %130 = sbr.rel (%p127) target = $region12
      $region11: #{tpu_custom_call.1} parent=5 // pred_region
        %s131 = ssub.s32 %s18, 1
        // Predicated region
        $region13: #{tpu_custom_call.1} parent=11 // pred_check
          %p132 = pneg %p91
        $region14: #{tpu_custom_call.1} parent=11 // pred_check_branch
          %134 = sbr.rel (%p132) target = $region16
        $region15: #{tpu_custom_call.1} parent=11 // pred_region
          %136 = vsyncadd [#allocation6], 0
          %s137 = sshll.u32 %s2, 4
          %s138 = int_to_ptr.hbm [resolvable:$true] %s137
          %s139 = sshll.u32 [#allocation7], 4
          %s140 = int_to_ptr.vmem [resolvable:$true] %s139
          %145 = dma.hbm_to_vmem [thread:$0]  %s138, 512, %s140, [#allocation6], 128, 128, 8
        $region16: #{tpu_custom_call.1} parent=11 // pred_fallthru
          _
      $region12: #{tpu_custom_call.1} parent=5 // pred_fallthru
        _
      %p146 = scmp.lt.s32.totalorder %s18, 2
      // Predicated region
      $region17: #{tpu_custom_call.1} parent=5 // pred_check
        %p147 = pneg %p146
      $region18: #{tpu_custom_call.1} parent=5 // pred_check_branch
        %149 = sbr.rel (%p147) target = $region20
      $region19: #{tpu_custom_call.1} parent=5 // pred_region
        // Predicated region
        $region21: #{tpu_custom_call.1} parent=19 // pred_check
          %p150 = pneg %p38
        $region22: #{tpu_custom_call.1} parent=19 // pred_check_branch
          %152 = sbr.rel (%p150) target = $region24
        $region23: #{tpu_custom_call.1} parent=19 // pred_region
          %s153 = sand.u32 %s28, 1
          %s154 = scalar_lea.sflag [#allocation3], %s153
          %s155 = sand.u32 %s28, 1
          %s156 = smul.addr %s155, 2
          %s157 = scalar_lea.vmem [#allocation2], %s156
          %s158 = smul.u32 2, %s18
          %160 = vsyncadd %s154, 0
          %s161 = scalar_lea.hbm %s0, %s158
          %s163 = sshll.u32 %s161, 4
          %s164 = int_to_ptr.hbm [resolvable:$true] %s163
          %s165 = sshll.u32 %s157, 4
          %s166 = int_to_ptr.vmem [resolvable:$true] %s165
          %168 = dma.hbm_to_vmem [thread:$0]  %s164, 32, %s166, %s154
        $region24: #{tpu_custom_call.1} parent=19 // pred_fallthru
          _
        // Predicated region
        $region25: #{tpu_custom_call.1} parent=19 // pred_check
          %p169 = pneg %p64
        $region26: #{tpu_custom_call.1} parent=19 // pred_check_branch
          %171 = sbr.rel (%p169) target = $region28
        $region27: #{tpu_custom_call.1} parent=19 // pred_region
          %s172 = sand.u32 %s18, 1
          %s173 = scalar_lea.sflag [#allocation6], %s172
          %s174 = sand.u32 %s54, 1
          %s175 = smul.addr %s174, 2
          %s176 = scalar_lea.vmem [#allocation5], %s175
          %s177 = smul.u32 2, %s18
          %179 = vsyncadd %s173, 0
          %s180 = scalar_lea.hbm %s1, %s177
          %s182 = sshll.u32 %s180, 4
          %s183 = int_to_ptr.hbm [resolvable:$true] %s182
          %s184 = sshll.u32 %s176, 4
          %s185 = int_to_ptr.vmem [resolvable:$true] %s184
          %187 = dma.hbm_to_vmem [thread:$0]  %s183, 32, %s185, %s173
        $region28: #{tpu_custom_call.1} parent=19 // pred_fallthru
          _
      $region20: #{tpu_custom_call.1} parent=5 // pred_fallthru
        _
      %p188 = scmp.le.s32.totalorder 1, %s18
      %p189 = scmp.lt.s32.totalorder %s18, 3
      %p190 = pnand %p188, %p189
      %p191 = pneg %p190
      // Predicated region
      $region29: #{tpu_custom_call.1} parent=5 // pred_check
        _
      $region30: #{tpu_custom_call.1} parent=5 // pred_check_branch
        %193 = sbr.rel (%p190) target = $region32
      $region31: #{tpu_custom_call.1} parent=5 // pred_region
        %s194 = ssub.s32 %s18, 1
        %s195 = sand.u32 %s31, 1
        %s196 = scalar_lea.sflag [#allocation3], %s195
        %s197 = sand.u32 %s31, 1
        %s198 = smul.addr %s197, 2
        %s199 = scalar_lea.vmem [#allocation2], %s198
        // Predicated region
        $region33: #{tpu_custom_call.1} parent=31 // pred_check
          %p200 = pneg %p44
        $region34: #{tpu_custom_call.1} parent=31 // pred_check_branch
          %202 = sbr.rel (%p200) target = $region36
        $region35: #{tpu_custom_call.1} parent=31 // pred_region
          %204 = dma.done %s196, 32
        $region36: #{tpu_custom_call.1} parent=31 // pred_fallthru
          _
        %s205 = sand.u32 %s23, 1
        %s206 = scalar_lea.sflag [#allocation6], %s205
        %s207 = sand.u32 %s57, 1
        %s208 = smul.addr %s207, 2
        %s209 = scalar_lea.vmem [#allocation5], %s208
        // Predicated region
        $region37: #{tpu_custom_call.1} parent=31 // pred_check
          %p210 = pneg %p70
        $region38: #{tpu_custom_call.1} parent=31 // pred_check_branch
          %212 = sbr.rel (%p210) target = $region40
        $region39: #{tpu_custom_call.1} parent=31 // pred_region
          %214 = dma.done %s206, 32
        $region40: #{tpu_custom_call.1} parent=31 // pred_fallthru
          _
        // Predicated region
        $region41: #{tpu_custom_call.1} parent=31 // pred_check
          %p215 = pneg %p91
        $region42: #{tpu_custom_call.1} parent=31 // pred_check_branch
          %217 = sbr.rel (%p215) target = $region44
        $region43: #{tpu_custom_call.1} parent=31 // pred_region
          %219 = dma.done [#allocation6], 512
        $region44: #{tpu_custom_call.1} parent=31 // pred_fallthru
          _
        %s220 = sand.u32 %s31, 1
        %s221 = scalar_lea.sflag [#allocation3], %s220
        %s222 = sand.u32 %s31, 1
        %s223 = smul.addr %s222, 2
        %s224 = scalar_lea.vmem [#allocation2], %s223
        %p225 = pneg %p44
        %p226 = pneg %p41
        %s227 = sand.u32 %s23, 1
        %s228 = scalar_lea.sflag [#allocation6], %s227
        %s229 = sand.u32 %s57, 1
        %s230 = smul.addr %s229, 2
        %s231 = scalar_lea.vmem [#allocation5], %s230
        %p232 = pneg %p70
        %p233 = pneg %p67
        %p234 = pneg %p91
        %p235 = pneg %p88
        %p236 = pneg %p117
        %p237 = pneg %p114
        %s238 = sand.u32 %s104, 1
        %s239 = scalar_lea.sflag [#allocation4], %s238
        %s240 = sand.u32 %s104, 1
        %s241 = smul.addr %s240, 2
        %s242 = scalar_lea.vmem [#allocation8], %s241
        %s243 = smul.u32 2, %s23
        %s244 = smul.u32 2, %s23
        %s245 = smul.u32 2, %s23
        %v246 = vlaneseq
        %v247 = vshrl.u32 %v246, 7
        %v248 = vadd.s32 %v247, 8
        %v249 = vadd.s32 %v247, 16
        %v250 = vadd.s32 %v247, 24
        %v251 = vadd.s32 %v247, 32
        %v252 = vadd.s32 %v247, 40
        %v253 = vadd.s32 %v247, 48
        %v254 = vadd.s32 %v247, 56
        %v255 = vld [vmem:[%s199] sm:$0x3]
        %v256 = vperm.slane %v255, 0
        %v257 = vperm.slane %v255, 1
        %vm258 = vcmp.eq.s32.totalorder %v247, %v256
        %vm259 = vcmp.eq.s32.totalorder %v247, %v257
        %vm260 = vcmp.eq.s32.totalorder %v248, %v256
        %vm261 = vcmp.eq.s32.totalorder %v248, %v257
        %vm262 = vcmp.eq.s32.totalorder %v249, %v256
        %vm263 = vcmp.eq.s32.totalorder %v249, %v257
        %vm264 = vcmp.eq.s32.totalorder %v250, %v256
        %vm265 = vcmp.eq.s32.totalorder %v250, %v257
        %vm266 = vcmp.eq.s32.totalorder %v251, %v256
        %vm267 = vcmp.eq.s32.totalorder %v251, %v257
        %vm268 = vcmp.eq.s32.totalorder %v252, %v256
        %vm269 = vcmp.eq.s32.totalorder %v252, %v257
        %vm270 = vcmp.eq.s32.totalorder %v253, %v256
        %vm271 = vcmp.eq.s32.totalorder %v253, %v257
        %vm272 = vcmp.eq.s32.totalorder %v254, %v256
        %vm273 = vcmp.eq.s32.totalorder %v254, %v257
        %v274 = vsel %vm258, 1, 0
        %v275 = vsel %vm259, 1, 0
        %v276 = vsel %vm260, 1, 0
        %v277 = vsel %vm261, 1, 0
        %v278 = vsel %vm262, 1, 0
        %v279 = vsel %vm263, 1, 0
        %v280 = vsel %vm264, 1, 0
        %v281 = vsel %vm265, 1, 0
        %v282 = vsel %vm266, 1, 0
        %v283 = vsel %vm267, 1, 0
        %v284 = vsel %vm268, 1, 0
        %v285 = vsel %vm269, 1, 0
        %v286 = vsel %vm270, 1, 0
        %v287 = vsel %vm271, 1, 0
        %v288 = vsel %vm272, 1, 0
        %v289 = vsel %vm273, 1, 0
        %v290 = vcvt.s32.f32 %v274
        %v291 = vcvt.s32.f32 %v275
        %v292 = vcvt.s32.f32 %v276
        %v293 = vcvt.s32.f32 %v277
        %v294 = vcvt.s32.f32 %v278
        %v295 = vcvt.s32.f32 %v279
        %v296 = vcvt.s32.f32 %v280
        %v297 = vcvt.s32.f32 %v281
        %v298 = vcvt.s32.f32 %v282
        %v299 = vcvt.s32.f32 %v283
        %v300 = vcvt.s32.f32 %v284
        %v301 = vcvt.s32.f32 %v285
        %v302 = vcvt.s32.f32 %v286
        %v303 = vcvt.s32.f32 %v287
        %v304 = vcvt.s32.f32 %v288
        %v305 = vcvt.s32.f32 %v289
        %v306 = vld [vmem:[%s209] sm:$0x3]
        %v307 = vperm.slane %v306, 0
        %v308 = vperm.slane %v306, 1
        %vm309 = vcmp.eq.s32.totalorder %v247, %v307
        %vm310 = vcmp.eq.s32.totalorder %v247, %v308
        %vm311 = vcmp.eq.s32.totalorder %v248, %v307
        %vm312 = vcmp.eq.s32.totalorder %v248, %v308
        %vm313 = vcmp.eq.s32.totalorder %v249, %v307
        %vm314 = vcmp.eq.s32.totalorder %v249, %v308
        %vm315 = vcmp.eq.s32.totalorder %v250, %v307
        %vm316 = vcmp.eq.s32.totalorder %v250, %v308
        %vm317 = vcmp.eq.s32.totalorder %v251, %v307
        %vm318 = vcmp.eq.s32.totalorder %v251, %v308
        %vm319 = vcmp.eq.s32.totalorder %v252, %v307
        %vm320 = vcmp.eq.s32.totalorder %v252, %v308
        %vm321 = vcmp.eq.s32.totalorder %v253, %v307
        %vm322 = vcmp.eq.s32.totalorder %v253, %v308
        %vm323 = vcmp.eq.s32.totalorder %v254, %v307
        %vm324 = vcmp.eq.s32.totalorder %v254, %v308
        %v325 = vsel %vm309, 1, 0
        %v326 = vsel %vm310, 1, 0
        %v327 = vsel %vm311, 1, 0
        %v328 = vsel %vm312, 1, 0
        %v329 = vsel %vm313, 1, 0
        %v330 = vsel %vm314, 1, 0
        %v331 = vsel %vm315, 1, 0
        %v332 = vsel %vm316, 1, 0
        %v333 = vsel %vm317, 1, 0
        %v334 = vsel %vm318, 1, 0
        %v335 = vsel %vm319, 1, 0
        %v336 = vsel %vm320, 1, 0
        %v337 = vsel %vm321, 1, 0
        %v338 = vsel %vm322, 1, 0
        %v339 = vsel %vm323, 1, 0
        %v340 = vsel %vm324, 1, 0
        %v341 = vcvt.s32.f32 %v325
        %v342 = vcvt.s32.f32 %v326
        %v343 = vcvt.s32.f32 %v327
        %v344 = vcvt.s32.f32 %v328
        %v345 = vcvt.s32.f32 %v329
        %v346 = vcvt.s32.f32 %v330
        %v347 = vcvt.s32.f32 %v331
        %v348 = vcvt.s32.f32 %v332
        %v349 = vcvt.s32.f32 %v333
        %v350 = vcvt.s32.f32 %v334
        %v351 = vcvt.s32.f32 %v335
        %v352 = vcvt.s32.f32 %v336
        %v353 = vcvt.s32.f32 %v337
        %v354 = vcvt.s32.f32 %v338
        %v355 = vcvt.s32.f32 %v339
        %v356 = vcvt.s32.f32 %v340
        %v357 = vld [vmem:[#allocation7] sm:$0xff]
        %v358 = vld [vmem:[#allocation7 + $0x8] sm:$0xff]
        %v359 = vld [vmem:[#allocation7 + $0x10] sm:$0xff]
        %v360 = vld [vmem:[#allocation7 + $0x18] sm:$0xff]
        %vm361 = vcmask 523264
        %v363 = vsel %vm361, %v357, 0
        %v366 = vsel %vm361, %v358, 0
        %v369 = vsel %vm361, %v359, 0
        %v372 = vsel %vm361, %v360, 0
        %374 = vmatpush.msra.mxu0 0.0
        %375 = vmatpush.msra.mxu0 0.0
        %376 = vmatpush.msra.mxu0 0.0
        %377 = vmatpush.msra.mxu0 0.0
        %378 = vmatpush.msra.mxu0 0.0
        %379 = vmatpush.msra.mxu0 0.0
        %380 = vmatpush.msra.mxu0 0.0
        %381 = vmatpush.msra.mxu0 0.0
        %v382 = vand.u32 %v304, 4294901760
        %383 = vmatpush.msra.mxu0 %v382
        %v384 = vand.u32 %v302, 4294901760
        %385 = vmatpush.msra.mxu0 %v384
        %v386 = vand.u32 %v300, 4294901760
        %387 = vmatpush.msra.mxu0 %v386
        %v388 = vand.u32 %v298, 4294901760
        %389 = vmatpush.msra.mxu0 %v388
        %v390 = vand.u32 %v296, 4294901760
        %391 = vmatpush.msra.mxu0 %v390
        %v392 = vand.u32 %v294, 4294901760
        %393 = vmatpush.msra.mxu0 %v392
        %v394 = vand.u32 %v292, 4294901760
        %395 = vmatpush.msra.mxu0 %v394
        %v396 = vand.u32 %v290, 4294901760
        %397 = vmatpush.msra.mxu0 %v396
        %v398 = vand.u32 %v363, 4294901760
        %v399 = vsub.f32 %v363, %v398
        %v400 = vand.u32 %v399, 4294901760
        %v401 = vsub.f32 %v399, %v400
        %v402 = vand.u32 %v401, 4294901760
        %403 = vmatmul.f32.gmra.mxu0 %v402
        %v404 = vpop.f32.mrf.mxu0
        %v405 = vadd.f32 0.0, %v404
        %v406 = vand.u32 %v366, 4294901760
        %v407 = vsub.f32 %v366, %v406
        %v408 = vand.u32 %v407, 4294901760
        %v409 = vsub.f32 %v407, %v408
        %v410 = vand.u32 %v409, 4294901760
        %411 = vmatmul.f32.gmra.mxu0 %v410
        %v412 = vpop.f32.mrf.mxu0
        %v413 = vadd.f32 0.0, %v412
        %v414 = vand.u32 %v369, 4294901760
        %v415 = vsub.f32 %v369, %v414
        %v416 = vand.u32 %v415, 4294901760
        %v417 = vsub.f32 %v415, %v416
        %v418 = vand.u32 %v417, 4294901760
        %419 = vmatmul.f32.gmra.mxu0 %v418
        %v420 = vpop.f32.mrf.mxu0
        %v421 = vadd.f32 0.0, %v420
        %v422 = vand.u32 %v372, 4294901760
        %v423 = vsub.f32 %v372, %v422
        %v424 = vand.u32 %v423, 4294901760
        %v425 = vsub.f32 %v423, %v424
        %v426 = vand.u32 %v425, 4294901760
        %427 = vmatmul.f32.gmra.mxu0 %v426
        %v428 = vpop.f32.mrf.mxu0
        %v429 = vadd.f32 0.0, %v428
        %430 = vdwg.mxu0
        %431 = vmatpush.msra.mxu0 0.0
        %432 = vmatpush.msra.mxu0 0.0
        %433 = vmatpush.msra.mxu0 0.0
        %434 = vmatpush.msra.mxu0 0.0
        %435 = vmatpush.msra.mxu0 0.0
        %436 = vmatpush.msra.mxu0 0.0
        %437 = vmatpush.msra.mxu0 0.0
        %438 = vmatpush.msra.mxu0 0.0
        %v439 = vand.u32 %v304, 4294901760
        %v440 = vsub.f32 %v304, %v439
        %v441 = vand.u32 %v440, 4294901760
        %v442 = vsub.f32 %v440, %v441
        %v443 = vand.u32 %v442, 4294901760
        %444 = vmatpush.msra.mxu0 %v443
        %v445 = vand.u32 %v302, 4294901760
        %v446 = vsub.f32 %v302, %v445
        %v447 = vand.u32 %v446, 4294901760
        %v448 = vsub.f32 %v446, %v447
        %v449 = vand.u32 %v448, 4294901760
        %450 = vmatpush.msra.mxu0 %v449
        %v451 = vand.u32 %v300, 4294901760
        %v452 = vsub.f32 %v300, %v451
        %v453 = vand.u32 %v452, 4294901760
        %v454 = vsub.f32 %v452, %v453
        %v455 = vand.u32 %v454, 4294901760
        %456 = vmatpush.msra.mxu0 %v455
        %v457 = vand.u32 %v298, 4294901760
        %v458 = vsub.f32 %v298, %v457
        %v459 = vand.u32 %v458, 4294901760
        %v460 = vsub.f32 %v458, %v459
        %v461 = vand.u32 %v460, 4294901760
        %462 = vmatpush.msra.mxu0 %v461
        %v463 = vand.u32 %v296, 4294901760
        %v464 = vsub.f32 %v296, %v463
        %v465 = vand.u32 %v464, 4294901760
        %v466 = vsub.f32 %v464, %v465
        %v467 = vand.u32 %v466, 4294901760
        %468 = vmatpush.msra.mxu0 %v467
        %v469 = vand.u32 %v294, 4294901760
        %v470 = vsub.f32 %v294, %v469
        %v471 = vand.u32 %v470, 4294901760
        %v472 = vsub.f32 %v470, %v471
        %v473 = vand.u32 %v472, 4294901760
        %474 = vmatpush.msra.mxu0 %v473
        %v475 = vand.u32 %v292, 4294901760
        %v476 = vsub.f32 %v292, %v475
        %v477 = vand.u32 %v476, 4294901760
        %v478 = vsub.f32 %v476, %v477
        %v479 = vand.u32 %v478, 4294901760
        %480 = vmatpush.msra.mxu0 %v479
        %v481 = vand.u32 %v290, 4294901760
        %v482 = vsub.f32 %v290, %v481
        %v483 = vand.u32 %v482, 4294901760
        %v484 = vsub.f32 %v482, %v483
        %v485 = vand.u32 %v484, 4294901760
        %486 = vmatpush.msra.mxu0 %v485
        %v487 = vand.u32 %v363, 4294901760
        %488 = vmatmul.f32.gmra.mxu0 %v487
        %v489 = vpop.f32.mrf.mxu0
        %v490 = vadd.f32 %v405, %v489
        %v491 = vand.u32 %v366, 4294901760
        %492 = vmatmul.f32.gmra.mxu0 %v491
        %v493 = vpop.f32.mrf.mxu0
        %v494 = vadd.f32 %v413, %v493
        %v495 = vand.u32 %v369, 4294901760
        %496 = vmatmul.f32.gmra.mxu0 %v495
        %v497 = vpop.f32.mrf.mxu0
        %v498 = vadd.f32 %v421, %v497
        %v499 = vand.u32 %v372, 4294901760
        %500 = vmatmul.f32.gmra.mxu0 %v499
        %v501 = vpop.f32.mrf.mxu0
        %v502 = vadd.f32 %v429, %v501
        %503 = vdwg.mxu0
        %504 = vmatpush.msra.mxu0 0.0
        %505 = vmatpush.msra.mxu0 0.0
        %506 = vmatpush.msra.mxu0 0.0
        %507 = vmatpush.msra.mxu0 0.0
        %508 = vmatpush.msra.mxu0 0.0
        %509 = vmatpush.msra.mxu0 0.0
        %510 = vmatpush.msra.mxu0 0.0
        %511 = vmatpush.msra.mxu0 0.0
        %v512 = vand.u32 %v304, 4294901760
        %v513 = vsub.f32 %v304, %v512
        %514 = vmatpush.msra.mxu0 %v513
        %v515 = vand.u32 %v302, 4294901760
        %v516 = vsub.f32 %v302, %v515
        %517 = vmatpush.msra.mxu0 %v516
        %v518 = vand.u32 %v300, 4294901760
        %v519 = vsub.f32 %v300, %v518
        %520 = vmatpush.msra.mxu0 %v519
        %v521 = vand.u32 %v298, 4294901760
        %v522 = vsub.f32 %v298, %v521
        %523 = vmatpush.msra.mxu0 %v522
        %v524 = vand.u32 %v296, 4294901760
        %v525 = vsub.f32 %v296, %v524
        %526 = vmatpush.msra.mxu0 %v525
        %v527 = vand.u32 %v294, 4294901760
        %v528 = vsub.f32 %v294, %v527
        %529 = vmatpush.msra.mxu0 %v528
        %v530 = vand.u32 %v292, 4294901760
        %v531 = vsub.f32 %v292, %v530
        %532 = vmatpush.msra.mxu0 %v531
        %v533 = vand.u32 %v290, 4294901760
        %v534 = vsub.f32 %v290, %v533
        %535 = vmatpush.msra.mxu0 %v534
        %v536 = vand.u32 %v363, 4294901760
        %v537 = vsub.f32 %v363, %v536
        %538 = vmatmul.f32.gmra.mxu0 %v537
        %v539 = vpop.f32.mrf.mxu0
        %v540 = vadd.f32 %v490, %v539
        %v541 = vand.u32 %v366, 4294901760
        %v542 = vsub.f32 %v366, %v541
        %543 = vmatmul.f32.gmra.mxu0 %v542
        %v544 = vpop.f32.mrf.mxu0
        %v545 = vadd.f32 %v494, %v544
        %v546 = vand.u32 %v369, 4294901760
        %v547 = vsub.f32 %v369, %v546
        %548 = vmatmul.f32.gmra.mxu0 %v547
        %v549 = vpop.f32.mrf.mxu0
        %v550 = vadd.f32 %v498, %v549
        %v551 = vand.u32 %v372, 4294901760
        %v552 = vsub.f32 %v372, %v551
        %553 = vmatmul.f32.gmra.mxu0 %v552
        %v554 = vpop.f32.mrf.mxu0
        %v555 = vadd.f32 %v502, %v554
        %556 = vdwg.mxu0
        %557 = vmatpush.msra.mxu0 0.0
        %558 = vmatpush.msra.mxu0 0.0
        %559 = vmatpush.msra.mxu0 0.0
        %560 = vmatpush.msra.mxu0 0.0
        %561 = vmatpush.msra.mxu0 0.0
        %562 = vmatpush.msra.mxu0 0.0
        %563 = vmatpush.msra.mxu0 0.0
        %564 = vmatpush.msra.mxu0 0.0
        %v565 = vand.u32 %v304, 4294901760
        %566 = vmatpush.msra.mxu0 %v565
        %v567 = vand.u32 %v302, 4294901760
        %568 = vmatpush.msra.mxu0 %v567
        %v569 = vand.u32 %v300, 4294901760
        %570 = vmatpush.msra.mxu0 %v569
        %v571 = vand.u32 %v298, 4294901760
        %572 = vmatpush.msra.mxu0 %v571
        %v573 = vand.u32 %v296, 4294901760
        %574 = vmatpush.msra.mxu0 %v573
        %v575 = vand.u32 %v294, 4294901760
        %576 = vmatpush.msra.mxu0 %v575
        %v577 = vand.u32 %v292, 4294901760
        %578 = vmatpush.msra.mxu0 %v577
        %v579 = vand.u32 %v290, 4294901760
        %580 = vmatpush.msra.mxu0 %v579
        %v581 = vand.u32 %v363, 4294901760
        %v582 = vsub.f32 %v363, %v581
        %v583 = vand.u32 %v582, 4294901760
        %584 = vmatmul.f32.gmra.mxu0 %v583
        %v585 = vpop.f32.mrf.mxu0
        %v586 = vadd.f32 %v540, %v585
        %v587 = vand.u32 %v366, 4294901760
        %v588 = vsub.f32 %v366, %v587
        %v589 = vand.u32 %v588, 4294901760
        %590 = vmatmul.f32.gmra.mxu0 %v589
        %v591 = vpop.f32.mrf.mxu0
        %v592 = vadd.f32 %v545, %v591
        %v593 = vand.u32 %v369, 4294901760
        %v594 = vsub.f32 %v369, %v593
        %v595 = vand.u32 %v594, 4294901760
        %596 = vmatmul.f32.gmra.mxu0 %v595
        %v597 = vpop.f32.mrf.mxu0
        %v598 = vadd.f32 %v550, %v597
        %v599 = vand.u32 %v372, 4294901760
        %v600 = vsub.f32 %v372, %v599
        %v601 = vand.u32 %v600, 4294901760
        %602 = vmatmul.f32.gmra.mxu0 %v601
        %v603 = vpop.f32.mrf.mxu0
        %v604 = vadd.f32 %v555, %v603
        %605 = vdwg.mxu0
        %606 = vmatpush.msra.mxu0 0.0
        %607 = vmatpush.msra.mxu0 0.0
        %608 = vmatpush.msra.mxu0 0.0
        %609 = vmatpush.msra.mxu0 0.0
        %610 = vmatpush.msra.mxu0 0.0
        %611 = vmatpush.msra.mxu0 0.0
        %612 = vmatpush.msra.mxu0 0.0
        %613 = vmatpush.msra.mxu0 0.0
        %v614 = vand.u32 %v304, 4294901760
        %v615 = vsub.f32 %v304, %v614
        %v616 = vand.u32 %v615, 4294901760
        %617 = vmatpush.msra.mxu0 %v616
        %v618 = vand.u32 %v302, 4294901760
        %v619 = vsub.f32 %v302, %v618
        %v620 = vand.u32 %v619, 4294901760
        %621 = vmatpush.msra.mxu0 %v620
        %v622 = vand.u32 %v300, 4294901760
        %v623 = vsub.f32 %v300, %v622
        %v624 = vand.u32 %v623, 4294901760
        %625 = vmatpush.msra.mxu0 %v624
        %v626 = vand.u32 %v298, 4294901760
        %v627 = vsub.f32 %v298, %v626
        %v628 = vand.u32 %v627, 4294901760
        %629 = vmatpush.msra.mxu0 %v628
        %v630 = vand.u32 %v296, 4294901760
        %v631 = vsub.f32 %v296, %v630
        %v632 = vand.u32 %v631, 4294901760
        %633 = vmatpush.msra.mxu0 %v632
        %v634 = vand.u32 %v294, 4294901760
        %v635 = vsub.f32 %v294, %v634
        %v636 = vand.u32 %v635, 4294901760
        %637 = vmatpush.msra.mxu0 %v636
        %v638 = vand.u32 %v292, 4294901760
        %v639 = vsub.f32 %v292, %v638
        %v640 = vand.u32 %v639, 4294901760
        %641 = vmatpush.msra.mxu0 %v640
        %v642 = vand.u32 %v290, 4294901760
        %v643 = vsub.f32 %v290, %v642
        %v644 = vand.u32 %v643, 4294901760
        %645 = vmatpush.msra.mxu0 %v644
        %v646 = vand.u32 %v363, 4294901760
        %647 = vmatmul.f32.gmra.mxu0 %v646
        %v648 = vpop.f32.mrf.mxu0
        %v649 = vadd.f32 %v586, %v648
        %v650 = vand.u32 %v366, 4294901760
        %651 = vmatmul.f32.gmra.mxu0 %v650
        %v652 = vpop.f32.mrf.mxu0
        %v653 = vadd.f32 %v592, %v652
        %v654 = vand.u32 %v369, 4294901760
        %655 = vmatmul.f32.gmra.mxu0 %v654
        %v656 = vpop.f32.mrf.mxu0
        %v657 = vadd.f32 %v598, %v656
        %v658 = vand.u32 %v372, 4294901760
        %659 = vmatmul.f32.gmra.mxu0 %v658
        %v660 = vpop.f32.mrf.mxu0
        %v661 = vadd.f32 %v604, %v660
        %662 = vdwg.mxu0
        %663 = vmatpush.msra.mxu0 0.0
        %664 = vmatpush.msra.mxu0 0.0
        %665 = vmatpush.msra.mxu0 0.0
        %666 = vmatpush.msra.mxu0 0.0
        %667 = vmatpush.msra.mxu0 0.0
        %668 = vmatpush.msra.mxu0 0.0
        %669 = vmatpush.msra.mxu0 0.0
        %670 = vmatpush.msra.mxu0 0.0
        %v671 = vand.u32 %v304, 4294901760
        %672 = vmatpush.msra.mxu0 %v671
        %v673 = vand.u32 %v302, 4294901760
        %674 = vmatpush.msra.mxu0 %v673
        %v675 = vand.u32 %v300, 4294901760
        %676 = vmatpush.msra.mxu0 %v675
        %v677 = vand.u32 %v298, 4294901760
        %678 = vmatpush.msra.mxu0 %v677
        %v679 = vand.u32 %v296, 4294901760
        %680 = vmatpush.msra.mxu0 %v679
        %v681 = vand.u32 %v294, 4294901760
        %682 = vmatpush.msra.mxu0 %v681
        %v683 = vand.u32 %v292, 4294901760
        %684 = vmatpush.msra.mxu0 %v683
        %v685 = vand.u32 %v290, 4294901760
        %686 = vmatpush.msra.mxu0 %v685
        %v687 = vand.u32 %v363, 4294901760
        %688 = vmatmul.f32.gmra.mxu0 %v687
        %v689 = vpop.f32.mrf.mxu0
        %v690 = vadd.f32 %v649, %v689
        %v691 = vand.u32 %v366, 4294901760
        %692 = vmatmul.f32.gmra.mxu0 %v691
        %v693 = vpop.f32.mrf.mxu0
        %v694 = vadd.f32 %v653, %v693
        %v695 = vand.u32 %v369, 4294901760
        %696 = vmatmul.f32.gmra.mxu0 %v695
        %v697 = vpop.f32.mrf.mxu0
        %v698 = vadd.f32 %v657, %v697
        %v699 = vand.u32 %v372, 4294901760
        %700 = vmatmul.f32.gmra.mxu0 %v699
        %v701 = vpop.f32.mrf.mxu0
        %v702 = vadd.f32 %v661, %v701
        %703 = vdwg.mxu0
        %704 = vmatpush.msra.mxu0 0.0
        %705 = vmatpush.msra.mxu0 0.0
        %706 = vmatpush.msra.mxu0 0.0
        %707 = vmatpush.msra.mxu0 0.0
        %708 = vmatpush.msra.mxu0 0.0
        %709 = vmatpush.msra.mxu0 0.0
        %710 = vmatpush.msra.mxu0 0.0
        %711 = vmatpush.msra.mxu0 0.0
        %v712 = vand.u32 %v305, 4294901760
        %713 = vmatpush.msra.mxu0 %v712
        %v714 = vand.u32 %v303, 4294901760
        %715 = vmatpush.msra.mxu0 %v714
        %v716 = vand.u32 %v301, 4294901760
        %717 = vmatpush.msra.mxu0 %v716
        %v718 = vand.u32 %v299, 4294901760
        %719 = vmatpush.msra.mxu0 %v718
        %v720 = vand.u32 %v297, 4294901760
        %721 = vmatpush.msra.mxu0 %v720
        %v722 = vand.u32 %v295, 4294901760
        %723 = vmatpush.msra.mxu0 %v722
        %v724 = vand.u32 %v293, 4294901760
        %725 = vmatpush.msra.mxu0 %v724
        %v726 = vand.u32 %v291, 4294901760
        %727 = vmatpush.msra.mxu0 %v726
        %v728 = vand.u32 %v363, 4294901760
        %v729 = vsub.f32 %v363, %v728
        %v730 = vand.u32 %v729, 4294901760
        %v731 = vsub.f32 %v729, %v730
        %v732 = vand.u32 %v731, 4294901760
        %733 = vmatmul.f32.gmra.mxu0 %v732
        %v734 = vpop.f32.mrf.mxu0
        %v735 = vadd.f32 0.0, %v734
        %v736 = vand.u32 %v366, 4294901760
        %v737 = vsub.f32 %v366, %v736
        %v738 = vand.u32 %v737, 4294901760
        %v739 = vsub.f32 %v737, %v738
        %v740 = vand.u32 %v739, 4294901760
        %741 = vmatmul.f32.gmra.mxu0 %v740
        %v742 = vpop.f32.mrf.mxu0
        %v743 = vadd.f32 0.0, %v742
        %v744 = vand.u32 %v369, 4294901760
        %v745 = vsub.f32 %v369, %v744
        %v746 = vand.u32 %v745, 4294901760
        %v747 = vsub.f32 %v745, %v746
        %v748 = vand.u32 %v747, 4294901760
        %749 = vmatmul.f32.gmra.mxu0 %v748
        %v750 = vpop.f32.mrf.mxu0
        %v751 = vadd.f32 0.0, %v750
        %v752 = vand.u32 %v372, 4294901760
        %v753 = vsub.f32 %v372, %v752
        %v754 = vand.u32 %v753, 4294901760
        %v755 = vsub.f32 %v753, %v754
        %v756 = vand.u32 %v755, 4294901760
        %757 = vmatmul.f32.gmra.mxu0 %v756
        %v758 = vpop.f32.mrf.mxu0
        %v759 = vadd.f32 0.0, %v758
        %760 = vdwg.mxu0
        %761 = vmatpush.msra.mxu0 0.0
        %762 = vmatpush.msra.mxu0 0.0
        %763 = vmatpush.msra.mxu0 0.0
        %764 = vmatpush.msra.mxu0 0.0
        %765 = vmatpush.msra.mxu0 0.0
        %766 = vmatpush.msra.mxu0 0.0
        %767 = vmatpush.msra.mxu0 0.0
        %768 = vmatpush.msra.mxu0 0.0
        %v769 = vand.u32 %v305, 4294901760
        %v770 = vsub.f32 %v305, %v769
        %v771 = vand.u32 %v770, 4294901760
        %v772 = vsub.f32 %v770, %v771
        %v773 = vand.u32 %v772, 4294901760
        %774 = vmatpush.msra.mxu0 %v773
        %v775 = vand.u32 %v303, 4294901760
        %v776 = vsub.f32 %v303, %v775
        %v777 = vand.u32 %v776, 4294901760
        %v778 = vsub.f32 %v776, %v777
        %v779 = vand.u32 %v778, 4294901760
        %780 = vmatpush.msra.mxu0 %v779
        %v781 = vand.u32 %v301, 4294901760
        %v782 = vsub.f32 %v301, %v781
        %v783 = vand.u32 %v782, 4294901760
        %v784 = vsub.f32 %v782, %v783
        %v785 = vand.u32 %v784, 4294901760
        %786 = vmatpush.msra.mxu0 %v785
        %v787 = vand.u32 %v299, 4294901760
        %v788 = vsub.f32 %v299, %v787
        %v789 = vand.u32 %v788, 4294901760
        %v790 = vsub.f32 %v788, %v789
        %v791 = vand.u32 %v790, 4294901760
        %792 = vmatpush.msra.mxu0 %v791
        %v793 = vand.u32 %v297, 4294901760
        %v794 = vsub.f32 %v297, %v793
        %v795 = vand.u32 %v794, 4294901760
        %v796 = vsub.f32 %v794, %v795
        %v797 = vand.u32 %v796, 4294901760
        %798 = vmatpush.msra.mxu0 %v797
        %v799 = vand.u32 %v295, 4294901760
        %v800 = vsub.f32 %v295, %v799
        %v801 = vand.u32 %v800, 4294901760
        %v802 = vsub.f32 %v800, %v801
        %v803 = vand.u32 %v802, 4294901760
        %804 = vmatpush.msra.mxu0 %v803
        %v805 = vand.u32 %v293, 4294901760
        %v806 = vsub.f32 %v293, %v805
        %v807 = vand.u32 %v806, 4294901760
        %v808 = vsub.f32 %v806, %v807
        %v809 = vand.u32 %v808, 4294901760
        %810 = vmatpush.msra.mxu0 %v809
        %v811 = vand.u32 %v291, 4294901760
        %v812 = vsub.f32 %v291, %v811
        %v813 = vand.u32 %v812, 4294901760
        %v814 = vsub.f32 %v812, %v813
        %v815 = vand.u32 %v814, 4294901760
        %816 = vmatpush.msra.mxu0 %v815
        %v817 = vand.u32 %v363, 4294901760
        %818 = vmatmul.f32.gmra.mxu0 %v817
        %v819 = vpop.f32.mrf.mxu0
        %v820 = vadd.f32 %v735, %v819
        %v821 = vand.u32 %v366, 4294901760
        %822 = vmatmul.f32.gmra.mxu0 %v821
        %v823 = vpop.f32.mrf.mxu0
        %v824 = vadd.f32 %v743, %v823
        %v825 = vand.u32 %v369, 4294901760
        %826 = vmatmul.f32.gmra.mxu0 %v825
        %v827 = vpop.f32.mrf.mxu0
        %v828 = vadd.f32 %v751, %v827
        %v829 = vand.u32 %v372, 4294901760
        %830 = vmatmul.f32.gmra.mxu0 %v829
        %v831 = vpop.f32.mrf.mxu0
        %v832 = vadd.f32 %v759, %v831
        %833 = vdwg.mxu0
        %834 = vmatpush.msra.mxu0 0.0
        %835 = vmatpush.msra.mxu0 0.0
        %836 = vmatpush.msra.mxu0 0.0
        %837 = vmatpush.msra.mxu0 0.0
        %838 = vmatpush.msra.mxu0 0.0
        %839 = vmatpush.msra.mxu0 0.0
        %840 = vmatpush.msra.mxu0 0.0
        %841 = vmatpush.msra.mxu0 0.0
        %v842 = vand.u32 %v305, 4294901760
        %v843 = vsub.f32 %v305, %v842
        %844 = vmatpush.msra.mxu0 %v843
        %v845 = vand.u32 %v303, 4294901760
        %v846 = vsub.f32 %v303, %v845
        %847 = vmatpush.msra.mxu0 %v846
        %v848 = vand.u32 %v301, 4294901760
        %v849 = vsub.f32 %v301, %v848
        %850 = vmatpush.msra.mxu0 %v849
        %v851 = vand.u32 %v299, 4294901760
        %v852 = vsub.f32 %v299, %v851
        %853 = vmatpush.msra.mxu0 %v852
        %v854 = vand.u32 %v297, 4294901760
        %v855 = vsub.f32 %v297, %v854
        %856 = vmatpush.msra.mxu0 %v855
        %v857 = vand.u32 %v295, 4294901760
        %v858 = vsub.f32 %v295, %v857
        %859 = vmatpush.msra.mxu0 %v858
        %v860 = vand.u32 %v293, 4294901760
        %v861 = vsub.f32 %v293, %v860
        %862 = vmatpush.msra.mxu0 %v861
        %v863 = vand.u32 %v291, 4294901760
        %v864 = vsub.f32 %v291, %v863
        %865 = vmatpush.msra.mxu0 %v864
        %v866 = vand.u32 %v363, 4294901760
        %v867 = vsub.f32 %v363, %v866
        %868 = vmatmul.f32.gmra.mxu0 %v867
        %v869 = vpop.f32.mrf.mxu0
        %v870 = vadd.f32 %v820, %v869
        %v871 = vand.u32 %v366, 4294901760
        %v872 = vsub.f32 %v366, %v871
        %873 = vmatmul.f32.gmra.mxu0 %v872
        %v874 = vpop.f32.mrf.mxu0
        %v875 = vadd.f32 %v824, %v874
        %v876 = vand.u32 %v369, 4294901760
        %v877 = vsub.f32 %v369, %v876
        %878 = vmatmul.f32.gmra.mxu0 %v877
        %v879 = vpop.f32.mrf.mxu0
        %v880 = vadd.f32 %v828, %v879
        %v881 = vand.u32 %v372, 4294901760
        %v882 = vsub.f32 %v372, %v881
        %883 = vmatmul.f32.gmra.mxu0 %v882
        %v884 = vpop.f32.mrf.mxu0
        %v885 = vadd.f32 %v832, %v884
        %886 = vdwg.mxu0
        %887 = vmatpush.msra.mxu0 0.0
        %888 = vmatpush.msra.mxu0 0.0
        %889 = vmatpush.msra.mxu0 0.0
        %890 = vmatpush.msra.mxu0 0.0
        %891 = vmatpush.msra.mxu0 0.0
        %892 = vmatpush.msra.mxu0 0.0
        %893 = vmatpush.msra.mxu0 0.0
        %894 = vmatpush.msra.mxu0 0.0
        %v895 = vand.u32 %v305, 4294901760
        %896 = vmatpush.msra.mxu0 %v895
        %v897 = vand.u32 %v303, 4294901760
        %898 = vmatpush.msra.mxu0 %v897
        %v899 = vand.u32 %v301, 4294901760
        %900 = vmatpush.msra.mxu0 %v899
        %v901 = vand.u32 %v299, 4294901760
        %902 = vmatpush.msra.mxu0 %v901
        %v903 = vand.u32 %v297, 4294901760
        %904 = vmatpush.msra.mxu0 %v903
        %v905 = vand.u32 %v295, 4294901760
        %906 = vmatpush.msra.mxu0 %v905
        %v907 = vand.u32 %v293, 4294901760
        %908 = vmatpush.msra.mxu0 %v907
        %v909 = vand.u32 %v291, 4294901760
        %910 = vmatpush.msra.mxu0 %v909
        %v911 = vand.u32 %v363, 4294901760
        %v912 = vsub.f32 %v363, %v911
        %v913 = vand.u32 %v912, 4294901760
        %914 = vmatmul.f32.gmra.mxu0 %v913
        %v915 = vpop.f32.mrf.mxu0
        %v916 = vadd.f32 %v870, %v915
        %v917 = vand.u32 %v366, 4294901760
        %v918 = vsub.f32 %v366, %v917
        %v919 = vand.u32 %v918, 4294901760
        %920 = vmatmul.f32.gmra.mxu0 %v919
        %v921 = vpop.f32.mrf.mxu0
        %v922 = vadd.f32 %v875, %v921
        %v923 = vand.u32 %v369, 4294901760
        %v924 = vsub.f32 %v369, %v923
        %v925 = vand.u32 %v924, 4294901760
        %926 = vmatmul.f32.gmra.mxu0 %v925
        %v927 = vpop.f32.mrf.mxu0
        %v928 = vadd.f32 %v880, %v927
        %v929 = vand.u32 %v372, 4294901760
        %v930 = vsub.f32 %v372, %v929
        %v931 = vand.u32 %v930, 4294901760
        %932 = vmatmul.f32.gmra.mxu0 %v931
        %v933 = vpop.f32.mrf.mxu0
        %v934 = vadd.f32 %v885, %v933
        %935 = vdwg.mxu0
        %936 = vmatpush.msra.mxu0 0.0
        %937 = vmatpush.msra.mxu0 0.0
        %938 = vmatpush.msra.mxu0 0.0
        %939 = vmatpush.msra.mxu0 0.0
        %940 = vmatpush.msra.mxu0 0.0
        %941 = vmatpush.msra.mxu0 0.0
        %942 = vmatpush.msra.mxu0 0.0
        %943 = vmatpush.msra.mxu0 0.0
        %v944 = vand.u32 %v305, 4294901760
        %v945 = vsub.f32 %v305, %v944
        %v946 = vand.u32 %v945, 4294901760
        %947 = vmatpush.msra.mxu0 %v946
        %v948 = vand.u32 %v303, 4294901760
        %v949 = vsub.f32 %v303, %v948
        %v950 = vand.u32 %v949, 4294901760
        %951 = vmatpush.msra.mxu0 %v950
        %v952 = vand.u32 %v301, 4294901760
        %v953 = vsub.f32 %v301, %v952
        %v954 = vand.u32 %v953, 4294901760
        %955 = vmatpush.msra.mxu0 %v954
        %v956 = vand.u32 %v299, 4294901760
        %v957 = vsub.f32 %v299, %v956
        %v958 = vand.u32 %v957, 4294901760
        %959 = vmatpush.msra.mxu0 %v958
        %v960 = vand.u32 %v297, 4294901760
        %v961 = vsub.f32 %v297, %v960
        %v962 = vand.u32 %v961, 4294901760
        %963 = vmatpush.msra.mxu0 %v962
        %v964 = vand.u32 %v295, 4294901760
        %v965 = vsub.f32 %v295, %v964
        %v966 = vand.u32 %v965, 4294901760
        %967 = vmatpush.msra.mxu0 %v966
        %v968 = vand.u32 %v293, 4294901760
        %v969 = vsub.f32 %v293, %v968
        %v970 = vand.u32 %v969, 4294901760
        %971 = vmatpush.msra.mxu0 %v970
        %v972 = vand.u32 %v291, 4294901760
        %v973 = vsub.f32 %v291, %v972
        %v974 = vand.u32 %v973, 4294901760
        %975 = vmatpush.msra.mxu0 %v974
        %v976 = vand.u32 %v363, 4294901760
        %977 = vmatmul.f32.gmra.mxu0 %v976
        %v978 = vpop.f32.mrf.mxu0
        %v979 = vadd.f32 %v916, %v978
        %v980 = vand.u32 %v366, 4294901760
        %981 = vmatmul.f32.gmra.mxu0 %v980
        %v982 = vpop.f32.mrf.mxu0
        %v983 = vadd.f32 %v922, %v982
        %v984 = vand.u32 %v369, 4294901760
        %985 = vmatmul.f32.gmra.mxu0 %v984
        %v986 = vpop.f32.mrf.mxu0
        %v987 = vadd.f32 %v928, %v986
        %v988 = vand.u32 %v372, 4294901760
        %989 = vmatmul.f32.gmra.mxu0 %v988
        %v990 = vpop.f32.mrf.mxu0
        %v991 = vadd.f32 %v934, %v990
        %992 = vdwg.mxu0
        %993 = vmatpush.msra.mxu0 0.0
        %994 = vmatpush.msra.mxu0 0.0
        %995 = vmatpush.msra.mxu0 0.0
        %996 = vmatpush.msra.mxu0 0.0
        %997 = vmatpush.msra.mxu0 0.0
        %998 = vmatpush.msra.mxu0 0.0
        %999 = vmatpush.msra.mxu0 0.0
        %1000 = vmatpush.msra.mxu0 0.0
        %v1001 = vand.u32 %v305, 4294901760
        %1002 = vmatpush.msra.mxu0 %v1001
        %v1003 = vand.u32 %v303, 4294901760
        %1004 = vmatpush.msra.mxu0 %v1003
        %v1005 = vand.u32 %v301, 4294901760
        %1006 = vmatpush.msra.mxu0 %v1005
        %v1007 = vand.u32 %v299, 4294901760
        %1008 = vmatpush.msra.mxu0 %v1007
        %v1009 = vand.u32 %v297, 4294901760
        %1010 = vmatpush.msra.mxu0 %v1009
        %v1011 = vand.u32 %v295, 4294901760
        %1012 = vmatpush.msra.mxu0 %v1011
        %v1013 = vand.u32 %v293, 4294901760
        %1014 = vmatpush.msra.mxu0 %v1013
        %v1015 = vand.u32 %v291, 4294901760
        %1016 = vmatpush.msra.mxu0 %v1015
        %v1017 = vand.u32 %v363, 4294901760
        %1018 = vmatmul.f32.gmra.mxu0 %v1017
        %v1019 = vpop.f32.mrf.mxu0
        %v1020 = vadd.f32 %v979, %v1019
        %v1021 = vand.u32 %v366, 4294901760
        %1022 = vmatmul.f32.gmra.mxu0 %v1021
        %v1023 = vpop.f32.mrf.mxu0
        %v1024 = vadd.f32 %v983, %v1023
        %v1025 = vand.u32 %v369, 4294901760
        %1026 = vmatmul.f32.gmra.mxu0 %v1025
        %v1027 = vpop.f32.mrf.mxu0
        %v1028 = vadd.f32 %v987, %v1027
        %v1029 = vand.u32 %v372, 4294901760
        %1030 = vmatmul.f32.gmra.mxu0 %v1029
        %v1031 = vpop.f32.mrf.mxu0
        %v1032 = vadd.f32 %v991, %v1031
        %1033 = vdwg.mxu0
        %1034 = vmatpush.msra.mxu0 0.0
        %1035 = vmatpush.msra.mxu0 0.0
        %1036 = vmatpush.msra.mxu0 0.0
        %1037 = vmatpush.msra.mxu0 0.0
        %1038 = vmatpush.msra.mxu0 0.0
        %1039 = vmatpush.msra.mxu0 0.0
        %1040 = vmatpush.msra.mxu0 0.0
        %1041 = vmatpush.msra.mxu0 0.0
        %v1042 = vand.u32 %v355, 4294901760
        %1043 = vmatpush.msra.mxu0 %v1042
        %v1044 = vand.u32 %v353, 4294901760
        %1045 = vmatpush.msra.mxu0 %v1044
        %v1046 = vand.u32 %v351, 4294901760
        %1047 = vmatpush.msra.mxu0 %v1046
        %v1048 = vand.u32 %v349, 4294901760
        %1049 = vmatpush.msra.mxu0 %v1048
        %v1050 = vand.u32 %v347, 4294901760
        %1051 = vmatpush.msra.mxu0 %v1050
        %v1052 = vand.u32 %v345, 4294901760
        %1053 = vmatpush.msra.mxu0 %v1052
        %v1054 = vand.u32 %v343, 4294901760
        %1055 = vmatpush.msra.mxu0 %v1054
        %v1056 = vand.u32 %v341, 4294901760
        %1057 = vmatpush.msra.mxu0 %v1056
        %v1058 = vand.u32 %v363, 4294901760
        %v1059 = vsub.f32 %v363, %v1058
        %v1060 = vand.u32 %v1059, 4294901760
        %v1061 = vsub.f32 %v1059, %v1060
        %v1062 = vand.u32 %v1061, 4294901760
        %1063 = vmatmul.f32.gmra.mxu0 %v1062
        %v1064 = vpop.f32.mrf.mxu0
        %v1065 = vadd.f32 0.0, %v1064
        %v1066 = vand.u32 %v366, 4294901760
        %v1067 = vsub.f32 %v366, %v1066
        %v1068 = vand.u32 %v1067, 4294901760
        %v1069 = vsub.f32 %v1067, %v1068
        %v1070 = vand.u32 %v1069, 4294901760
        %1071 = vmatmul.f32.gmra.mxu0 %v1070
        %v1072 = vpop.f32.mrf.mxu0
        %v1073 = vadd.f32 0.0, %v1072
        %v1074 = vand.u32 %v369, 4294901760
        %v1075 = vsub.f32 %v369, %v1074
        %v1076 = vand.u32 %v1075, 4294901760
        %v1077 = vsub.f32 %v1075, %v1076
        %v1078 = vand.u32 %v1077, 4294901760
        %1079 = vmatmul.f32.gmra.mxu0 %v1078
        %v1080 = vpop.f32.mrf.mxu0
        %v1081 = vadd.f32 0.0, %v1080
        %v1082 = vand.u32 %v372, 4294901760
        %v1083 = vsub.f32 %v372, %v1082
        %v1084 = vand.u32 %v1083, 4294901760
        %v1085 = vsub.f32 %v1083, %v1084
        %v1086 = vand.u32 %v1085, 4294901760
        %1087 = vmatmul.f32.gmra.mxu0 %v1086
        %v1088 = vpop.f32.mrf.mxu0
        %v1089 = vadd.f32 0.0, %v1088
        %1090 = vdwg.mxu0
        %1091 = vmatpush.msra.mxu0 0.0
        %1092 = vmatpush.msra.mxu0 0.0
        %1093 = vmatpush.msra.mxu0 0.0
        %1094 = vmatpush.msra.mxu0 0.0
        %1095 = vmatpush.msra.mxu0 0.0
        %1096 = vmatpush.msra.mxu0 0.0
        %1097 = vmatpush.msra.mxu0 0.0
        %1098 = vmatpush.msra.mxu0 0.0
        %v1099 = vand.u32 %v355, 4294901760
        %v1100 = vsub.f32 %v355, %v1099
        %v1101 = vand.u32 %v1100, 4294901760
        %v1102 = vsub.f32 %v1100, %v1101
        %v1103 = vand.u32 %v1102, 4294901760
        %1104 = vmatpush.msra.mxu0 %v1103
        %v1105 = vand.u32 %v353, 4294901760
        %v1106 = vsub.f32 %v353, %v1105
        %v1107 = vand.u32 %v1106, 4294901760
        %v1108 = vsub.f32 %v1106, %v1107
        %v1109 = vand.u32 %v1108, 4294901760
        %1110 = vmatpush.msra.mxu0 %v1109
        %v1111 = vand.u32 %v351, 4294901760
        %v1112 = vsub.f32 %v351, %v1111
        %v1113 = vand.u32 %v1112, 4294901760
        %v1114 = vsub.f32 %v1112, %v1113
        %v1115 = vand.u32 %v1114, 4294901760
        %1116 = vmatpush.msra.mxu0 %v1115
        %v1117 = vand.u32 %v349, 4294901760
        %v1118 = vsub.f32 %v349, %v1117
        %v1119 = vand.u32 %v1118, 4294901760
        %v1120 = vsub.f32 %v1118, %v1119
        %v1121 = vand.u32 %v1120, 4294901760
        %1122 = vmatpush.msra.mxu0 %v1121
        %v1123 = vand.u32 %v347, 4294901760
        %v1124 = vsub.f32 %v347, %v1123
        %v1125 = vand.u32 %v1124, 4294901760
        %v1126 = vsub.f32 %v1124, %v1125
        %v1127 = vand.u32 %v1126, 4294901760
        %1128 = vmatpush.msra.mxu0 %v1127
        %v1129 = vand.u32 %v345, 4294901760
        %v1130 = vsub.f32 %v345, %v1129
        %v1131 = vand.u32 %v1130, 4294901760
        %v1132 = vsub.f32 %v1130, %v1131
        %v1133 = vand.u32 %v1132, 4294901760
        %1134 = vmatpush.msra.mxu0 %v1133
        %v1135 = vand.u32 %v343, 4294901760
        %v1136 = vsub.f32 %v343, %v1135
        %v1137 = vand.u32 %v1136, 4294901760
        %v1138 = vsub.f32 %v1136, %v1137
        %v1139 = vand.u32 %v1138, 4294901760
        %1140 = vmatpush.msra.mxu0 %v1139
        %v1141 = vand.u32 %v341, 4294901760
        %v1142 = vsub.f32 %v341, %v1141
        %v1143 = vand.u32 %v1142, 4294901760
        %v1144 = vsub.f32 %v1142, %v1143
        %v1145 = vand.u32 %v1144, 4294901760
        %1146 = vmatpush.msra.mxu0 %v1145
        %v1147 = vand.u32 %v363, 4294901760
        %1148 = vmatmul.f32.gmra.mxu0 %v1147
        %v1149 = vpop.f32.mrf.mxu0
        %v1150 = vadd.f32 %v1065, %v1149
        %v1151 = vand.u32 %v366, 4294901760
        %1152 = vmatmul.f32.gmra.mxu0 %v1151
        %v1153 = vpop.f32.mrf.mxu0
        %v1154 = vadd.f32 %v1073, %v1153
        %v1155 = vand.u32 %v369, 4294901760
        %1156 = vmatmul.f32.gmra.mxu0 %v1155
        %v1157 = vpop.f32.mrf.mxu0
        %v1158 = vadd.f32 %v1081, %v1157
        %v1159 = vand.u32 %v372, 4294901760
        %1160 = vmatmul.f32.gmra.mxu0 %v1159
        %v1161 = vpop.f32.mrf.mxu0
        %v1162 = vadd.f32 %v1089, %v1161
        %1163 = vdwg.mxu0
        %1164 = vmatpush.msra.mxu0 0.0
        %1165 = vmatpush.msra.mxu0 0.0
        %1166 = vmatpush.msra.mxu0 0.0
        %1167 = vmatpush.msra.mxu0 0.0
        %1168 = vmatpush.msra.mxu0 0.0
        %1169 = vmatpush.msra.mxu0 0.0
        %1170 = vmatpush.msra.mxu0 0.0
        %1171 = vmatpush.msra.mxu0 0.0
        %v1172 = vand.u32 %v355, 4294901760
        %v1173 = vsub.f32 %v355, %v1172
        %1174 = vmatpush.msra.mxu0 %v1173
        %v1175 = vand.u32 %v353, 4294901760
        %v1176 = vsub.f32 %v353, %v1175
        %1177 = vmatpush.msra.mxu0 %v1176
        %v1178 = vand.u32 %v351, 4294901760
        %v1179 = vsub.f32 %v351, %v1178
        %1180 = vmatpush.msra.mxu0 %v1179
        %v1181 = vand.u32 %v349, 4294901760
        %v1182 = vsub.f32 %v349, %v1181
        %1183 = vmatpush.msra.mxu0 %v1182
        %v1184 = vand.u32 %v347, 4294901760
        %v1185 = vsub.f32 %v347, %v1184
        %1186 = vmatpush.msra.mxu0 %v1185
        %v1187 = vand.u32 %v345, 4294901760
        %v1188 = vsub.f32 %v345, %v1187
        %1189 = vmatpush.msra.mxu0 %v1188
        %v1190 = vand.u32 %v343, 4294901760
        %v1191 = vsub.f32 %v343, %v1190
        %1192 = vmatpush.msra.mxu0 %v1191
        %v1193 = vand.u32 %v341, 4294901760
        %v1194 = vsub.f32 %v341, %v1193
        %1195 = vmatpush.msra.mxu0 %v1194
        %v1196 = vand.u32 %v363, 4294901760
        %v1197 = vsub.f32 %v363, %v1196
        %1198 = vmatmul.f32.gmra.mxu0 %v1197
        %v1199 = vpop.f32.mrf.mxu0
        %v1200 = vadd.f32 %v1150, %v1199
        %v1201 = vand.u32 %v366, 4294901760
        %v1202 = vsub.f32 %v366, %v1201
        %1203 = vmatmul.f32.gmra.mxu0 %v1202
        %v1204 = vpop.f32.mrf.mxu0
        %v1205 = vadd.f32 %v1154, %v1204
        %v1206 = vand.u32 %v369, 4294901760
        %v1207 = vsub.f32 %v369, %v1206
        %1208 = vmatmul.f32.gmra.mxu0 %v1207
        %v1209 = vpop.f32.mrf.mxu0
        %v1210 = vadd.f32 %v1158, %v1209
        %v1211 = vand.u32 %v372, 4294901760
        %v1212 = vsub.f32 %v372, %v1211
        %1213 = vmatmul.f32.gmra.mxu0 %v1212
        %v1214 = vpop.f32.mrf.mxu0
        %v1215 = vadd.f32 %v1162, %v1214
        %1216 = vdwg.mxu0
        %1217 = vmatpush.msra.mxu0 0.0
        %1218 = vmatpush.msra.mxu0 0.0
        %1219 = vmatpush.msra.mxu0 0.0
        %1220 = vmatpush.msra.mxu0 0.0
        %1221 = vmatpush.msra.mxu0 0.0
        %1222 = vmatpush.msra.mxu0 0.0
        %1223 = vmatpush.msra.mxu0 0.0
        %1224 = vmatpush.msra.mxu0 0.0
        %v1225 = vand.u32 %v355, 4294901760
        %1226 = vmatpush.msra.mxu0 %v1225
        %v1227 = vand.u32 %v353, 4294901760
        %1228 = vmatpush.msra.mxu0 %v1227
        %v1229 = vand.u32 %v351, 4294901760
        %1230 = vmatpush.msra.mxu0 %v1229
        %v1231 = vand.u32 %v349, 4294901760
        %1232 = vmatpush.msra.mxu0 %v1231
        %v1233 = vand.u32 %v347, 4294901760
        %1234 = vmatpush.msra.mxu0 %v1233
        %v1235 = vand.u32 %v345, 4294901760
        %1236 = vmatpush.msra.mxu0 %v1235
        %v1237 = vand.u32 %v343, 4294901760
        %1238 = vmatpush.msra.mxu0 %v1237
        %v1239 = vand.u32 %v341, 4294901760
        %1240 = vmatpush.msra.mxu0 %v1239
        %v1241 = vand.u32 %v363, 4294901760
        %v1242 = vsub.f32 %v363, %v1241
        %v1243 = vand.u32 %v1242, 4294901760
        %1244 = vmatmul.f32.gmra.mxu0 %v1243
        %v1245 = vpop.f32.mrf.mxu0
        %v1246 = vadd.f32 %v1200, %v1245
        %v1247 = vand.u32 %v366, 4294901760
        %v1248 = vsub.f32 %v366, %v1247
        %v1249 = vand.u32 %v1248, 4294901760
        %1250 = vmatmul.f32.gmra.mxu0 %v1249
        %v1251 = vpop.f32.mrf.mxu0
        %v1252 = vadd.f32 %v1205, %v1251
        %v1253 = vand.u32 %v369, 4294901760
        %v1254 = vsub.f32 %v369, %v1253
        %v1255 = vand.u32 %v1254, 4294901760
        %1256 = vmatmul.f32.gmra.mxu0 %v1255
        %v1257 = vpop.f32.mrf.mxu0
        %v1258 = vadd.f32 %v1210, %v1257
        %v1259 = vand.u32 %v372, 4294901760
        %v1260 = vsub.f32 %v372, %v1259
        %v1261 = vand.u32 %v1260, 4294901760
        %1262 = vmatmul.f32.gmra.mxu0 %v1261
        %v1263 = vpop.f32.mrf.mxu0
        %v1264 = vadd.f32 %v1215, %v1263
        %1265 = vdwg.mxu0
        %1266 = vmatpush.msra.mxu0 0.0
        %1267 = vmatpush.msra.mxu0 0.0
        %1268 = vmatpush.msra.mxu0 0.0
        %1269 = vmatpush.msra.mxu0 0.0
        %1270 = vmatpush.msra.mxu0 0.0
        %1271 = vmatpush.msra.mxu0 0.0
        %1272 = vmatpush.msra.mxu0 0.0
        %1273 = vmatpush.msra.mxu0 0.0
        %v1274 = vand.u32 %v355, 4294901760
        %v1275 = vsub.f32 %v355, %v1274
        %v1276 = vand.u32 %v1275, 4294901760
        %1277 = vmatpush.msra.mxu0 %v1276
        %v1278 = vand.u32 %v353, 4294901760
        %v1279 = vsub.f32 %v353, %v1278
        %v1280 = vand.u32 %v1279, 4294901760
        %1281 = vmatpush.msra.mxu0 %v1280
        %v1282 = vand.u32 %v351, 4294901760
        %v1283 = vsub.f32 %v351, %v1282
        %v1284 = vand.u32 %v1283, 4294901760
        %1285 = vmatpush.msra.mxu0 %v1284
        %v1286 = vand.u32 %v349, 4294901760
        %v1287 = vsub.f32 %v349, %v1286
        %v1288 = vand.u32 %v1287, 4294901760
        %1289 = vmatpush.msra.mxu0 %v1288
        %v1290 = vand.u32 %v347, 4294901760
        %v1291 = vsub.f32 %v347, %v1290
        %v1292 = vand.u32 %v1291, 4294901760
        %1293 = vmatpush.msra.mxu0 %v1292
        %v1294 = vand.u32 %v345, 4294901760
        %v1295 = vsub.f32 %v345, %v1294
        %v1296 = vand.u32 %v1295, 4294901760
        %1297 = vmatpush.msra.mxu0 %v1296
        %v1298 = vand.u32 %v343, 4294901760
        %v1299 = vsub.f32 %v343, %v1298
        %v1300 = vand.u32 %v1299, 4294901760
        %1301 = vmatpush.msra.mxu0 %v1300
        %v1302 = vand.u32 %v341, 4294901760
        %v1303 = vsub.f32 %v341, %v1302
        %v1304 = vand.u32 %v1303, 4294901760
        %1305 = vmatpush.msra.mxu0 %v1304
        %v1306 = vand.u32 %v363, 4294901760
        %1307 = vmatmul.f32.gmra.mxu0 %v1306
        %v1308 = vpop.f32.mrf.mxu0
        %v1309 = vadd.f32 %v1246, %v1308
        %v1310 = vand.u32 %v366, 4294901760
        %1311 = vmatmul.f32.gmra.mxu0 %v1310
        %v1312 = vpop.f32.mrf.mxu0
        %v1313 = vadd.f32 %v1252, %v1312
        %v1314 = vand.u32 %v369, 4294901760
        %1315 = vmatmul.f32.gmra.mxu0 %v1314
        %v1316 = vpop.f32.mrf.mxu0
        %v1317 = vadd.f32 %v1258, %v1316
        %v1318 = vand.u32 %v372, 4294901760
        %1319 = vmatmul.f32.gmra.mxu0 %v1318
        %v1320 = vpop.f32.mrf.mxu0
        %v1321 = vadd.f32 %v1264, %v1320
        %1322 = vdwg.mxu0
        %1323 = vmatpush.msra.mxu0 0.0
        %1324 = vmatpush.msra.mxu0 0.0
        %1325 = vmatpush.msra.mxu0 0.0
        %1326 = vmatpush.msra.mxu0 0.0
        %1327 = vmatpush.msra.mxu0 0.0
        %1328 = vmatpush.msra.mxu0 0.0
        %1329 = vmatpush.msra.mxu0 0.0
        %1330 = vmatpush.msra.mxu0 0.0
        %v1331 = vand.u32 %v355, 4294901760
        %1332 = vmatpush.msra.mxu0 %v1331
        %v1333 = vand.u32 %v353, 4294901760
        %1334 = vmatpush.msra.mxu0 %v1333
        %v1335 = vand.u32 %v351, 4294901760
        %1336 = vmatpush.msra.mxu0 %v1335
        %v1337 = vand.u32 %v349, 4294901760
        %1338 = vmatpush.msra.mxu0 %v1337
        %v1339 = vand.u32 %v347, 4294901760
        %1340 = vmatpush.msra.mxu0 %v1339
        %v1341 = vand.u32 %v345, 4294901760
        %1342 = vmatpush.msra.mxu0 %v1341
        %v1343 = vand.u32 %v343, 4294901760
        %1344 = vmatpush.msra.mxu0 %v1343
        %v1345 = vand.u32 %v341, 4294901760
        %1346 = vmatpush.msra.mxu0 %v1345
        %v1347 = vand.u32 %v363, 4294901760
        %1348 = vmatmul.f32.gmra.mxu0 %v1347
        %v1349 = vpop.f32.mrf.mxu0
        %v1350 = vadd.f32 %v1309, %v1349
        %v1351 = vand.u32 %v366, 4294901760
        %1352 = vmatmul.f32.gmra.mxu0 %v1351
        %v1353 = vpop.f32.mrf.mxu0
        %v1354 = vadd.f32 %v1313, %v1353
        %v1355 = vand.u32 %v369, 4294901760
        %1356 = vmatmul.f32.gmra.mxu0 %v1355
        %v1357 = vpop.f32.mrf.mxu0
        %v1358 = vadd.f32 %v1317, %v1357
        %v1359 = vand.u32 %v372, 4294901760
        %1360 = vmatmul.f32.gmra.mxu0 %v1359
        %v1361 = vpop.f32.mrf.mxu0
        %v1362 = vadd.f32 %v1321, %v1361
        %1363 = vdwg.mxu0
        %1364 = vmatpush.msra.mxu0 0.0
        %1365 = vmatpush.msra.mxu0 0.0
        %1366 = vmatpush.msra.mxu0 0.0
        %1367 = vmatpush.msra.mxu0 0.0
        %1368 = vmatpush.msra.mxu0 0.0
        %1369 = vmatpush.msra.mxu0 0.0
        %1370 = vmatpush.msra.mxu0 0.0
        %1371 = vmatpush.msra.mxu0 0.0
        %v1372 = vand.u32 %v356, 4294901760
        %1373 = vmatpush.msra.mxu0 %v1372
        %v1374 = vand.u32 %v354, 4294901760
        %1375 = vmatpush.msra.mxu0 %v1374
        %v1376 = vand.u32 %v352, 4294901760
        %1377 = vmatpush.msra.mxu0 %v1376
        %v1378 = vand.u32 %v350, 4294901760
        %1379 = vmatpush.msra.mxu0 %v1378
        %v1380 = vand.u32 %v348, 4294901760
        %1381 = vmatpush.msra.mxu0 %v1380
        %v1382 = vand.u32 %v346, 4294901760
        %1383 = vmatpush.msra.mxu0 %v1382
        %v1384 = vand.u32 %v344, 4294901760
        %1385 = vmatpush.msra.mxu0 %v1384
        %v1386 = vand.u32 %v342, 4294901760
        %1387 = vmatpush.msra.mxu0 %v1386
        %v1388 = vand.u32 %v363, 4294901760
        %v1389 = vsub.f32 %v363, %v1388
        %v1390 = vand.u32 %v1389, 4294901760
        %v1391 = vsub.f32 %v1389, %v1390
        %v1392 = vand.u32 %v1391, 4294901760
        %1393 = vmatmul.f32.gmra.mxu0 %v1392
        %v1394 = vpop.f32.mrf.mxu0
        %v1395 = vadd.f32 0.0, %v1394
        %v1396 = vand.u32 %v366, 4294901760
        %v1397 = vsub.f32 %v366, %v1396
        %v1398 = vand.u32 %v1397, 4294901760
        %v1399 = vsub.f32 %v1397, %v1398
        %v1400 = vand.u32 %v1399, 4294901760
        %1401 = vmatmul.f32.gmra.mxu0 %v1400
        %v1402 = vpop.f32.mrf.mxu0
        %v1403 = vadd.f32 0.0, %v1402
        %v1404 = vand.u32 %v369, 4294901760
        %v1405 = vsub.f32 %v369, %v1404
        %v1406 = vand.u32 %v1405, 4294901760
        %v1407 = vsub.f32 %v1405, %v1406
        %v1408 = vand.u32 %v1407, 4294901760
        %1409 = vmatmul.f32.gmra.mxu0 %v1408
        %v1410 = vpop.f32.mrf.mxu0
        %v1411 = vadd.f32 0.0, %v1410
        %v1412 = vand.u32 %v372, 4294901760
        %v1413 = vsub.f32 %v372, %v1412
        %v1414 = vand.u32 %v1413, 4294901760
        %v1415 = vsub.f32 %v1413, %v1414
        %v1416 = vand.u32 %v1415, 4294901760
        %1417 = vmatmul.f32.gmra.mxu0 %v1416
        %v1418 = vpop.f32.mrf.mxu0
        %v1419 = vadd.f32 0.0, %v1418
        %1420 = vdwg.mxu0
        %1421 = vmatpush.msra.mxu0 0.0
        %1422 = vmatpush.msra.mxu0 0.0
        %1423 = vmatpush.msra.mxu0 0.0
        %1424 = vmatpush.msra.mxu0 0.0
        %1425 = vmatpush.msra.mxu0 0.0
        %1426 = vmatpush.msra.mxu0 0.0
        %1427 = vmatpush.msra.mxu0 0.0
        %1428 = vmatpush.msra.mxu0 0.0
        %v1429 = vand.u32 %v356, 4294901760
        %v1430 = vsub.f32 %v356, %v1429
        %v1431 = vand.u32 %v1430, 4294901760
        %v1432 = vsub.f32 %v1430, %v1431
        %v1433 = vand.u32 %v1432, 4294901760
        %1434 = vmatpush.msra.mxu0 %v1433
        %v1435 = vand.u32 %v354, 4294901760
        %v1436 = vsub.f32 %v354, %v1435
        %v1437 = vand.u32 %v1436, 4294901760
        %v1438 = vsub.f32 %v1436, %v1437
        %v1439 = vand.u32 %v1438, 4294901760
        %1440 = vmatpush.msra.mxu0 %v1439
        %v1441 = vand.u32 %v352, 4294901760
        %v1442 = vsub.f32 %v352, %v1441
        %v1443 = vand.u32 %v1442, 4294901760
        %v1444 = vsub.f32 %v1442, %v1443
        %v1445 = vand.u32 %v1444, 4294901760
        %1446 = vmatpush.msra.mxu0 %v1445
        %v1447 = vand.u32 %v350, 4294901760
        %v1448 = vsub.f32 %v350, %v1447
        %v1449 = vand.u32 %v1448, 4294901760
        %v1450 = vsub.f32 %v1448, %v1449
        %v1451 = vand.u32 %v1450, 4294901760
        %1452 = vmatpush.msra.mxu0 %v1451
        %v1453 = vand.u32 %v348, 4294901760
        %v1454 = vsub.f32 %v348, %v1453
        %v1455 = vand.u32 %v1454, 4294901760
        %v1456 = vsub.f32 %v1454, %v1455
        %v1457 = vand.u32 %v1456, 4294901760
        %1458 = vmatpush.msra.mxu0 %v1457
        %v1459 = vand.u32 %v346, 4294901760
        %v1460 = vsub.f32 %v346, %v1459
        %v1461 = vand.u32 %v1460, 4294901760
        %v1462 = vsub.f32 %v1460, %v1461
        %v1463 = vand.u32 %v1462, 4294901760
        %1464 = vmatpush.msra.mxu0 %v1463
        %v1465 = vand.u32 %v344, 4294901760
        %v1466 = vsub.f32 %v344, %v1465
        %v1467 = vand.u32 %v1466, 4294901760
        %v1468 = vsub.f32 %v1466, %v1467
        %v1469 = vand.u32 %v1468, 4294901760
        %1470 = vmatpush.msra.mxu0 %v1469
        %v1471 = vand.u32 %v342, 4294901760
        %v1472 = vsub.f32 %v342, %v1471
        %v1473 = vand.u32 %v1472, 4294901760
        %v1474 = vsub.f32 %v1472, %v1473
        %v1475 = vand.u32 %v1474, 4294901760
        %1476 = vmatpush.msra.mxu0 %v1475
        %v1477 = vand.u32 %v363, 4294901760
        %1478 = vmatmul.f32.gmra.mxu0 %v1477
        %v1479 = vpop.f32.mrf.mxu0
        %v1480 = vadd.f32 %v1395, %v1479
        %v1481 = vand.u32 %v366, 4294901760
        %1482 = vmatmul.f32.gmra.mxu0 %v1481
        %v1483 = vpop.f32.mrf.mxu0
        %v1484 = vadd.f32 %v1403, %v1483
        %v1485 = vand.u32 %v369, 4294901760
        %1486 = vmatmul.f32.gmra.mxu0 %v1485
        %v1487 = vpop.f32.mrf.mxu0
        %v1488 = vadd.f32 %v1411, %v1487
        %v1489 = vand.u32 %v372, 4294901760
        %1490 = vmatmul.f32.gmra.mxu0 %v1489
        %v1491 = vpop.f32.mrf.mxu0
        %v1492 = vadd.f32 %v1419, %v1491
        %1493 = vdwg.mxu0
        %1494 = vmatpush.msra.mxu0 0.0
        %1495 = vmatpush.msra.mxu0 0.0
        %1496 = vmatpush.msra.mxu0 0.0
        %1497 = vmatpush.msra.mxu0 0.0
        %1498 = vmatpush.msra.mxu0 0.0
        %1499 = vmatpush.msra.mxu0 0.0
        %1500 = vmatpush.msra.mxu0 0.0
        %1501 = vmatpush.msra.mxu0 0.0
        %v1502 = vand.u32 %v356, 4294901760
        %v1503 = vsub.f32 %v356, %v1502
        %1504 = vmatpush.msra.mxu0 %v1503
        %v1505 = vand.u32 %v354, 4294901760
        %v1506 = vsub.f32 %v354, %v1505
        %1507 = vmatpush.msra.mxu0 %v1506
        %v1508 = vand.u32 %v352, 4294901760
        %v1509 = vsub.f32 %v352, %v1508
        %1510 = vmatpush.msra.mxu0 %v1509
        %v1511 = vand.u32 %v350, 4294901760
        %v1512 = vsub.f32 %v350, %v1511
        %1513 = vmatpush.msra.mxu0 %v1512
        %v1514 = vand.u32 %v348, 4294901760
        %v1515 = vsub.f32 %v348, %v1514
        %1516 = vmatpush.msra.mxu0 %v1515
        %v1517 = vand.u32 %v346, 4294901760
        %v1518 = vsub.f32 %v346, %v1517
        %1519 = vmatpush.msra.mxu0 %v1518
        %v1520 = vand.u32 %v344, 4294901760
        %v1521 = vsub.f32 %v344, %v1520
        %1522 = vmatpush.msra.mxu0 %v1521
        %v1523 = vand.u32 %v342, 4294901760
        %v1524 = vsub.f32 %v342, %v1523
        %1525 = vmatpush.msra.mxu0 %v1524
        %v1526 = vand.u32 %v363, 4294901760
        %v1527 = vsub.f32 %v363, %v1526
        %1528 = vmatmul.f32.gmra.mxu0 %v1527
        %v1529 = vpop.f32.mrf.mxu0
        %v1530 = vadd.f32 %v1480, %v1529
        %v1531 = vand.u32 %v366, 4294901760
        %v1532 = vsub.f32 %v366, %v1531
        %1533 = vmatmul.f32.gmra.mxu0 %v1532
        %v1534 = vpop.f32.mrf.mxu0
        %v1535 = vadd.f32 %v1484, %v1534
        %v1536 = vand.u32 %v369, 4294901760
        %v1537 = vsub.f32 %v369, %v1536
        %1538 = vmatmul.f32.gmra.mxu0 %v1537
        %v1539 = vpop.f32.mrf.mxu0
        %v1540 = vadd.f32 %v1488, %v1539
        %v1541 = vand.u32 %v372, 4294901760
        %v1542 = vsub.f32 %v372, %v1541
        %1543 = vmatmul.f32.gmra.mxu0 %v1542
        %v1544 = vpop.f32.mrf.mxu0
        %v1545 = vadd.f32 %v1492, %v1544
        %1546 = vdwg.mxu0
        %1547 = vmatpush.msra.mxu0 0.0
        %1548 = vmatpush.msra.mxu0 0.0
        %1549 = vmatpush.msra.mxu0 0.0
        %1550 = vmatpush.msra.mxu0 0.0
        %1551 = vmatpush.msra.mxu0 0.0
        %1552 = vmatpush.msra.mxu0 0.0
        %1553 = vmatpush.msra.mxu0 0.0
        %1554 = vmatpush.msra.mxu0 0.0
        %v1555 = vand.u32 %v356, 4294901760
        %1556 = vmatpush.msra.mxu0 %v1555
        %v1557 = vand.u32 %v354, 4294901760
        %1558 = vmatpush.msra.mxu0 %v1557
        %v1559 = vand.u32 %v352, 4294901760
        %1560 = vmatpush.msra.mxu0 %v1559
        %v1561 = vand.u32 %v350, 4294901760
        %1562 = vmatpush.msra.mxu0 %v1561
        %v1563 = vand.u32 %v348, 4294901760
        %1564 = vmatpush.msra.mxu0 %v1563
        %v1565 = vand.u32 %v346, 4294901760
        %1566 = vmatpush.msra.mxu0 %v1565
        %v1567 = vand.u32 %v344, 4294901760
        %1568 = vmatpush.msra.mxu0 %v1567
        %v1569 = vand.u32 %v342, 4294901760
        %1570 = vmatpush.msra.mxu0 %v1569
        %v1571 = vand.u32 %v363, 4294901760
        %v1572 = vsub.f32 %v363, %v1571
        %v1573 = vand.u32 %v1572, 4294901760
        %1574 = vmatmul.f32.gmra.mxu0 %v1573
        %v1575 = vpop.f32.mrf.mxu0
        %v1576 = vadd.f32 %v1530, %v1575
        %v1577 = vand.u32 %v366, 4294901760
        %v1578 = vsub.f32 %v366, %v1577
        %v1579 = vand.u32 %v1578, 4294901760
        %1580 = vmatmul.f32.gmra.mxu0 %v1579
        %v1581 = vpop.f32.mrf.mxu0
        %v1582 = vadd.f32 %v1535, %v1581
        %v1583 = vand.u32 %v369, 4294901760
        %v1584 = vsub.f32 %v369, %v1583
        %v1585 = vand.u32 %v1584, 4294901760
        %1586 = vmatmul.f32.gmra.mxu0 %v1585
        %v1587 = vpop.f32.mrf.mxu0
        %v1588 = vadd.f32 %v1540, %v1587
        %v1589 = vand.u32 %v372, 4294901760
        %v1590 = vsub.f32 %v372, %v1589
        %v1591 = vand.u32 %v1590, 4294901760
        %1592 = vmatmul.f32.gmra.mxu0 %v1591
        %v1593 = vpop.f32.mrf.mxu0
        %v1594 = vadd.f32 %v1545, %v1593
        %1595 = vdwg.mxu0
        %1596 = vmatpush.msra.mxu0 0.0
        %1597 = vmatpush.msra.mxu0 0.0
        %1598 = vmatpush.msra.mxu0 0.0
        %1599 = vmatpush.msra.mxu0 0.0
        %1600 = vmatpush.msra.mxu0 0.0
        %1601 = vmatpush.msra.mxu0 0.0
        %1602 = vmatpush.msra.mxu0 0.0
        %1603 = vmatpush.msra.mxu0 0.0
        %v1604 = vand.u32 %v356, 4294901760
        %v1605 = vsub.f32 %v356, %v1604
        %v1606 = vand.u32 %v1605, 4294901760
        %1607 = vmatpush.msra.mxu0 %v1606
        %v1608 = vand.u32 %v354, 4294901760
        %v1609 = vsub.f32 %v354, %v1608
        %v1610 = vand.u32 %v1609, 4294901760
        %1611 = vmatpush.msra.mxu0 %v1610
        %v1612 = vand.u32 %v352, 4294901760
        %v1613 = vsub.f32 %v352, %v1612
        %v1614 = vand.u32 %v1613, 4294901760
        %1615 = vmatpush.msra.mxu0 %v1614
        %v1616 = vand.u32 %v350, 4294901760
        %v1617 = vsub.f32 %v350, %v1616
        %v1618 = vand.u32 %v1617, 4294901760
        %1619 = vmatpush.msra.mxu0 %v1618
        %v1620 = vand.u32 %v348, 4294901760
        %v1621 = vsub.f32 %v348, %v1620
        %v1622 = vand.u32 %v1621, 4294901760
        %1623 = vmatpush.msra.mxu0 %v1622
        %v1624 = vand.u32 %v346, 4294901760
        %v1625 = vsub.f32 %v346, %v1624
        %v1626 = vand.u32 %v1625, 4294901760
        %1627 = vmatpush.msra.mxu0 %v1626
        %v1628 = vand.u32 %v344, 4294901760
        %v1629 = vsub.f32 %v344, %v1628
        %v1630 = vand.u32 %v1629, 4294901760
        %1631 = vmatpush.msra.mxu0 %v1630
        %v1632 = vand.u32 %v342, 4294901760
        %v1633 = vsub.f32 %v342, %v1632
        %v1634 = vand.u32 %v1633, 4294901760
        %1635 = vmatpush.msra.mxu0 %v1634
        %v1636 = vand.u32 %v363, 4294901760
        %1637 = vmatmul.f32.gmra.mxu0 %v1636
        %v1638 = vpop.f32.mrf.mxu0
        %v1639 = vadd.f32 %v1576, %v1638
        %v1640 = vand.u32 %v366, 4294901760
        %1641 = vmatmul.f32.gmra.mxu0 %v1640
        %v1642 = vpop.f32.mrf.mxu0
        %v1643 = vadd.f32 %v1582, %v1642
        %v1644 = vand.u32 %v369, 4294901760
        %1645 = vmatmul.f32.gmra.mxu0 %v1644
        %v1646 = vpop.f32.mrf.mxu0
        %v1647 = vadd.f32 %v1588, %v1646
        %v1648 = vand.u32 %v372, 4294901760
        %1649 = vmatmul.f32.gmra.mxu0 %v1648
        %v1650 = vpop.f32.mrf.mxu0
        %v1651 = vadd.f32 %v1594, %v1650
        %1652 = vdwg.mxu0
        %1653 = vmatpush.msra.mxu0 0.0
        %1654 = vmatpush.msra.mxu0 0.0
        %1655 = vmatpush.msra.mxu0 0.0
        %1656 = vmatpush.msra.mxu0 0.0
        %1657 = vmatpush.msra.mxu0 0.0
        %1658 = vmatpush.msra.mxu0 0.0
        %1659 = vmatpush.msra.mxu0 0.0
        %1660 = vmatpush.msra.mxu0 0.0
        %v1661 = vand.u32 %v356, 4294901760
        %1662 = vmatpush.msra.mxu0 %v1661
        %v1663 = vand.u32 %v354, 4294901760
        %1664 = vmatpush.msra.mxu0 %v1663
        %v1665 = vand.u32 %v352, 4294901760
        %1666 = vmatpush.msra.mxu0 %v1665
        %v1667 = vand.u32 %v350, 4294901760
        %1668 = vmatpush.msra.mxu0 %v1667
        %v1669 = vand.u32 %v348, 4294901760
        %1670 = vmatpush.msra.mxu0 %v1669
        %v1671 = vand.u32 %v346, 4294901760
        %1672 = vmatpush.msra.mxu0 %v1671
        %v1673 = vand.u32 %v344, 4294901760
        %1674 = vmatpush.msra.mxu0 %v1673
        %v1675 = vand.u32 %v342, 4294901760
        %1676 = vmatpush.msra.mxu0 %v1675
        %v1677 = vand.u32 %v363, 4294901760
        %1678 = vmatmul.f32.gmra.mxu0 %v1677
        %v1679 = vpop.f32.mrf.mxu0
        %v1680 = vadd.f32 %v1639, %v1679
        %v1681 = vand.u32 %v366, 4294901760
        %1682 = vmatmul.f32.gmra.mxu0 %v1681
        %v1683 = vpop.f32.mrf.mxu0
        %v1684 = vadd.f32 %v1643, %v1683
        %v1685 = vand.u32 %v369, 4294901760
        %1686 = vmatmul.f32.gmra.mxu0 %v1685
        %v1687 = vpop.f32.mrf.mxu0
        %v1688 = vadd.f32 %v1647, %v1687
        %v1689 = vand.u32 %v372, 4294901760
        %1690 = vmatmul.f32.gmra.mxu0 %v1689
        %v1691 = vpop.f32.mrf.mxu0
        %v1692 = vadd.f32 %v1651, %v1691
        %1693 = vdwg.mxu0
        %v1694 = vmul.f32 %v690, %v1350
        %v1695 = vmul.f32 %v1020, %v1680
        %v1696 = vmul.f32 %v694, %v1354
        %v1697 = vmul.f32 %v1024, %v1684
        %v1698 = vmul.f32 %v698, %v1358
        %v1699 = vmul.f32 %v1028, %v1688
        %v1700 = vmul.f32 %v702, %v1362
        %v1701 = vmul.f32 %v1032, %v1692
        %v1702 = vadd.f32 %v1694, %v1696
        %v1703 = vadd.f32 %v1702, %v1698
        %v1704 = vadd.f32 %v1703, %v1700
        %v1705 = vrot.slane %v1704, 4
        %v1706 = vadd.f32 %v1704, %v1705
        %v1707 = vrot.slane %v1706, 2
        %v1708 = vadd.f32 %v1706, %v1707
        %v1709 = vrot.slane %v1708, 1
        %v1710 = vadd.f32 %v1708, %v1709
        %v1711 = vadd.f32 %v1695, %v1697
        %v1712 = vadd.f32 %v1711, %v1699
        %v1713 = vadd.f32 %v1712, %v1701
        %v1714 = vrot.slane %v1713, 4
        %v1715 = vadd.f32 %v1713, %v1714
        %v1716 = vrot.slane %v1715, 2
        %v1717 = vadd.f32 %v1715, %v1716
        %v1718 = vrot.slane %v1717, 1
        %v1719 = vadd.f32 %v1717, %v1718
        %v1722 = vrot.slane %v1719, 7
        %vm1723 = vcmask 1040384
        %v1724 = vsel %vm1723, %v1710, %v1722
        %v1726 = vlaneseq
        %vm1727 = vcmp.ge.s32.totalorder %v1726, 0
        %vm1728 = vcmp.lt.s32.totalorder %v1726, 256
        %vm1729 = vmand %vm1727, %vm1728
        %1730 = vst.msk [vmem:[%s242] sm:$0x3] %vm1729, %v1724
        %s1731 = sand.u32 %s104, 1
        %s1732 = scalar_lea.sflag [#allocation4], %s1731
        %s1733 = sand.u32 %s104, 1
        %s1734 = smul.addr %s1733, 2
        %s1735 = scalar_lea.vmem [#allocation8], %s1734
        // Predicated region
        $region45: #{tpu_custom_call.1} parent=31 // pred_check
          %p1736 = pneg %p114
        $region46: #{tpu_custom_call.1} parent=31 // pred_check_branch
          %1738 = sbr.rel (%p1736) target = $region48
        $region47: #{tpu_custom_call.1} parent=31 // pred_region
          %s1739 = smul.u32 2, %s23
          %1741 = vsyncadd %s1732, 0
          %s1742 = scalar_lea.hbm %s3, %s1739
          %s1744 = sshll.u32 %s1735, 4
          %s1745 = int_to_ptr.vmem [resolvable:$true] %s1744
          %s1746 = sshll.u32 %s1742, 4
          %s1747 = int_to_ptr.hbm [resolvable:$true] %s1746
          %1749 = dma.vmem_to_hbm [thread:$0]  %s1745, 32, %s1747, %s1732
        $region48: #{tpu_custom_call.1} parent=31 // pred_fallthru
          _
      $region32: #{tpu_custom_call.1} parent=5 // pred_fallthru
        _
      %p1750 = scmp.le.s32.totalorder 2, %s18
      // Predicated region
      $region49: #{tpu_custom_call.1} parent=5 // pred_check
        %p1751 = pneg %p1750
      $region50: #{tpu_custom_call.1} parent=5 // pred_check_branch
        %1753 = sbr.rel (%p1751) target = $region52
      $region51: #{tpu_custom_call.1} parent=5 // pred_region
        %s1754 = ssub.s32 %s18, 2
        // Predicated region
        $region53: #{tpu_custom_call.1} parent=51 // pred_check
          %p1755 = pneg %p120
        $region54: #{tpu_custom_call.1} parent=51 // pred_check_branch
          %1757 = sbr.rel (%p1755) target = $region56
        $region55: #{tpu_custom_call.1} parent=51 // pred_region
          %s1758 = sand.u32 %s105, 1
          %s1759 = scalar_lea.sflag [#allocation4], %s1758
          %s1760 = sand.u32 %s105, 1
          %s1761 = smul.addr %s1760, 2
          %s1762 = scalar_lea.vmem [#allocation8], %s1761
          %1764 = dma.done %s1759, 32
        $region56: #{tpu_custom_call.1} parent=51 // pred_fallthru
          _
      $region52: #{tpu_custom_call.1} parent=5 // pred_fallthru
        _
    $region6: #{tpu_custom_call.1} parent=1 // loop_footer
      %s22 = sadd.s32 1, %s18
    $region7: #{tpu_custom_call.1} parent=1 // loop_footer_branch
      %17 = sbr.rel target = $region3
    $region8: #{tpu_custom_call.1} parent=1 // loop_exit
      _
    %1765 = vsyncpa [#allocation3], 1
    %s1766 = scalar_lea.sflag [#allocation3], 1
    %1767 = vsyncpa %s1766, 1
    %1768 = vsyncpa [#allocation6], 1
    %s1769 = scalar_lea.sflag [#allocation6], 1
    %1770 = vsyncpa %s1769, 1
    %1771 = vsyncpa [#allocation4], 1
    %s1772 = scalar_lea.sflag [#allocation4], 1
    %1773 = vsyncpa %s1772, 1

</llo_original>
